<compile_context>
chip_gen: v7x
topology: tpu7x:2x2x1
jax: 0.10.0
libtpu: 0.0.40
codegen_flags: <defaults>
</compile_context>

<pallas_src>
import functools

import jax
import jax.numpy as jnp
from jax import lax
from jax.experimental import pallas as pl
from jax.experimental.pallas import tpu as pltpu

D_MSA = 32      # d_msa
N_HEADS = 4
D_FF = 64       # d_ff
LN_EPS = 1e-5   # torch.nn.LayerNorm default


def _layernorm(v, g, b):
    mu = jnp.mean(v, axis=-1, keepdims=True)
    var = jnp.mean((v - mu) ** 2, axis=-1, keepdims=True)
    return (v - mu) * lax.rsqrt(var + LN_EPS) * g + b


def _encoder_kernel(x_ref, w32_ref, w2_ref, vec_ref, o_ref,
                    *, bt, n, l, d, h, dff):
    """One grid step = `bt` batch elements; x_ref is (bt*n*l, d) tokens."""
    dh = d // h
    r = bt * n * l                       # tokens in this block
    pw = 6 * d + dff                     # lane-dense fused-projection width (256)

    x2d = x_ref[...]                     # (r, d) f32

    # ---- packed parameters ---------------------------------------------------
    # w32 columns: [wq*s | wk | wv | wpq*s | wpk | wo | w1 | blockdiag]
    w_proj = w32_ref[:, 0:pw]                    # (d, 256) bf16, lane-dense RHS
    w_o = w32_ref[:, 5 * d:6 * d]                # (d, d)   bf16
    w_1 = w32_ref[:, 6 * d:6 * d + dff]          # (d, dff) bf16
    bd = w32_ref[:, 6 * d + dff:7 * d + dff]     # (d, d)   bf16 block-diag ones (head-group sum)
    w_2 = w2_ref[...]                            # (dff, d) bf16

    ln1g = vec_ref[0:1, 0:d]
    ln1b = vec_ref[1:2, 0:d]
    ln2g = vec_ref[2:3, 0:d]
    ln2b = vec_ref[3:4, 0:d]
    b_o = vec_ref[4:5, 0:d]
    b_2 = vec_ref[5:6, 0:d]
    b_1 = vec_ref[6:7, 0:dff]
    b_p = vec_ref[7:8, :]                        # (1, 256) fused projection bias (zero-padded)

    # ---- LayerNorm 1 + fused 5-way projection (single 256-wide MXU pass) -----
    ln1 = _layernorm(x2d, ln1g, ln1b)                                    # f32
    p = jnp.dot(ln1.astype(jnp.bfloat16), w_proj,
                preferred_element_type=jnp.float32) + b_p                # (r, 256) f32
    q2 = p[:, 0:d]                       # scale pre-folded into wq/bq
    k2 = p[:, d:2 * d]
    v2 = p[:, 2 * d:3 * d]
    pq2 = p[:, 3 * d:4 * d]              # scale pre-folded into wpq/bpq
    pk2 = p[:, 4 * d:5 * d]
    # lanes 5d..256 of p (ln1 @ [wo|w1]) come for free in the same MXU pass and are ignored.

    # ---- PositionWiseWeightFactor: softmax over the N MSA rows ----------------
    # Head-group (8-lane) sums + re-expansion done by one bf16 matmul against the
    # block-diagonal ones matrix; everything stays at (r, d) lane width.
    pq4 = pq2.reshape(bt, n, l, d)
    pk4 = pk2.reshape(bt, n, l, d)
    prod = (pq4[:, 0:1] * pk4).reshape(r, d)                             # query row 0 vs all rows
    plog4 = jnp.dot(prod.astype(jnp.bfloat16), bd,
                    preferred_element_type=jnp.float32).reshape(bt, n, l, d)
    pmax = jnp.max(plog4, axis=1, keepdims=True)
    pexp = jnp.exp(plog4 - pmax)
    pden = jnp.sum(pexp, axis=1, keepdims=True)
    patt = (pexp * pl.reciprocal(pden, approx=True)).reshape(r, d)       # (r, d)
    qw2 = q2 * patt                                                      # weighted, pre-scaled q

    # ---- soft tied attention over residues ------------------------------------
    # MSA-row sum folded into the contraction: per head, q/k/v lane-folded to
    # (bt, l, n*dh) so logits/output are K = n*dh batched matmuls; no (bt*n, l, l)
    # score tensor, no reduce over n, no broadcast of att.
    head_out = []
    for hh in range(h):                                  # static, tiny head loop
        sl = slice(hh * dh, (hh + 1) * dh)
        q4 = qw2[:, sl].reshape(bt, n, l, dh)
        k4 = k2[:, sl].reshape(bt, n, l, dh)
        v4 = v2[:, sl].reshape(bt, n, l, dh)
        qf = jnp.concatenate([q4[:, i] for i in range(n)], axis=-1).astype(jnp.bfloat16)
        kf = jnp.concatenate([k4[:, i] for i in range(n)], axis=-1).astype(jnp.bfloat16)
        vf = jnp.concatenate([v4[:, i] for i in range(n)], axis=-1).astype(jnp.bfloat16)

        lg = jnp.einsum('blk,bmk->blm', qf, kf,
                        preferred_element_type=jnp.float32)              # (bt, l, l), K = n*dh
        m = jnp.max(lg, axis=-1, keepdims=True)
        e = jnp.exp(lg - m)
        att = (e * pl.reciprocal(jnp.sum(e, axis=-1, keepdims=True), approx=True)
               ).astype(jnp.bfloat16)
        of = jnp.einsum('blm,bmk->blk', att, vf,
                        preferred_element_type=jnp.float32)              # (bt, l, n*dh)
        o4 = jnp.stack([of[:, :, i * dh:(i + 1) * dh] for i in range(n)], axis=1)
        head_out.append(o4.reshape(r, dh))                               # (r, dh)

    # single output-projection matmul with K = d (instead of 4 K=dh matmuls)
    attn_cat = jnp.concatenate(head_out, axis=-1).astype(jnp.bfloat16)   # (r, d)
    attn = jnp.dot(attn_cat, w_o, preferred_element_type=jnp.float32)

    # ---- Residual 1 (dropout = identity) --------------------------------------
    x1 = x2d + attn + b_o

    # ---- FeedForward + Residual 2 ---------------------------------------------
    ln2 = _layernorm(x1, ln2g, ln2b)
    h1 = jnp.maximum(jnp.dot(ln2.astype(jnp.bfloat16), w_1,
                             preferred_element_type=jnp.float32) + b_1, 0.0)
    ff = jnp.dot(h1.astype(jnp.bfloat16), w_2,
                 preferred_element_type=jnp.float32) + b_2

    o_ref[...] = (x1 + ff).astype(o_ref.dtype)


def pack_params(params, h=N_HEADS):
    """Pack the 20 logical parameter arrays into 3 lane-aligned slabs.

    Folds the attention scales into wq/bq and wpq/bpq, and appends the exact
    block-diagonal ones matrix used for head-group sums (so the kernel never
    rebuilds iota constants per grid step).
    """
    (ln1g, ln1b, wq, bq, wk, bk, wv, bv, wpq, bpq, wpk, bpk,
     wo, bo, ln2g, ln2b, w1, b1, w2, b2) = params
    d, dff = wq.shape[0], w1.shape[1]
    dh = d // h
    scale = dh ** (-0.5)

    wq_s, bq_s = wq * scale, bq * scale
    wpq_s, bpq_s = wpq * scale, bpq * scale

    gid = jnp.arange(d) // dh
    blockdiag = (gid[:, None] == gid[None, :]).astype(jnp.float32)     # exact in bf16

    # bf16 weight slab: [wq*s | wk | wv | wpq*s | wpk | wo | w1 | blockdiag]
    w32 = jnp.concatenate([wq_s, wk, wv, wpq_s, wpk, wo, w1, blockdiag],
                          axis=1).astype(jnp.bfloat16)                 # (d, 7d+dff)
    w2b = w2.astype(jnp.bfloat16)

    lanes = 6 * d + dff                  # lane-dense fused-projection width (256)

    def row(v):
        v = v.reshape(1, -1)
        return jnp.pad(v, ((0, 0), (0, lanes - v.shape[1])))

    bp = jnp.concatenate([bq_s, bk, bv, bpq_s, bpk], axis=1)           # (1, 5d)
    vec = jnp.concatenate([row(ln1g), row(ln1b), row(ln2g), row(ln2b),
                           row(bo), row(b2), row(b1), row(bp)], axis=0)  # (8, lanes) f32
    return w32, w2b, vec


def encoder_layer(x, params, *, block_b=None):
    B, N, L, D = x.shape
    assert D == D_MSA and D % N_HEADS == 0
    if block_b is None:
        # smallest batch block with R multiple of 8 -> most grid steps (pipelining + megacore)
        block_b = B
        for cand in range(1, B + 1):
            if B % cand == 0 and (cand * N * L) % 8 == 0:
                block_b = cand
                break
    bt = block_b
    assert B % bt == 0 and (bt * N * L) % 8 == 0
    R = bt * N * L
    T = B * N * L

    w32, w2, vec = pack_params(params)
    x_flat = x.reshape(T, D)

    # advisory cost estimate + explicit VMEM budget (with headroom, clamped for v7x/v5e)
    slab_bytes = w32.size * 2 + w2.size * 2 + vec.size * 4
    flops = int(2 * T * D * (6 * D + D_FF)      # fused 256-wide projection
                + 2 * T * D * D                 # block-diag head sums
                + 4 * B * L * L * N * D         # tied attention logits + att@V
                + 2 * T * D * D                 # output projection
                + 4 * T * D * D_FF)             # feed-forward
    transc = int(T * D + N_HEADS * B * L * L + T)
    bytes_acc = int(2 * T * D * 4 + slab_bytes)
    step_bytes = (4 * R * D * 4                 # double-buffered in + out blocks
                  + R * (6 * D + D_FF) * 4      # fused projection result
                  + 10 * R * D * 4              # attention / FF intermediates
                  + 2 * slab_bytes)
    vmem_limit = int(min(max(2 * step_bytes, 32 * 1024 * 1024), 96 * 1024 * 1024))

    kernel = functools.partial(_encoder_kernel, bt=bt, n=N, l=L, d=D,
                               h=N_HEADS, dff=D_FF)
    out = pl.pallas_call(
        kernel,
        out_shape=jax.ShapeDtypeStruct((T, D), x.dtype),
        grid_spec=pltpu.PrefetchScalarGridSpec(
            num_scalar_prefetch=0,
            grid=(B // bt,),
            in_specs=[
                pl.BlockSpec((R, D), lambda b: (b, 0)),           # tokens
                pl.BlockSpec(w32.shape, lambda b: (0, 0)),        # fused weights + blockdiag (bf16)
                pl.BlockSpec(w2.shape, lambda b: (0, 0)),         # ff second weight (bf16)
                pl.BlockSpec(vec.shape, lambda b: (0, 0)),        # biases + LN params (f32)
            ],
            out_specs=pl.BlockSpec((R, D), lambda b: (b, 0)),
        ),
        compiler_params=pltpu.CompilerParams(
            dimension_semantics=("parallel",),                    # batch steps independent
            vmem_limit_bytes=vmem_limit),
        cost_estimate=pl.CostEstimate(flops=flops, transcendentals=transc,
                                      bytes_accessed=bytes_acc),
    )(x_flat, w32, w2, vec)
    return out.reshape(B, N, L, D)


def init_params(key, d=D_MSA, dff=D_FF):
    keys = jax.random.split(key, 12)
    s = 0.1

    def lin(k, din, dout):
        k1, k2 = jax.random.split(k)
        return (jax.random.normal(k1, (din, dout), jnp.float32) * s,
                jax.random.normal(k2, (1, dout), jnp.float32) * s)

    wq, bq = lin(keys[0], d, d)
    wk, bk = lin(keys[1], d, d)
    wv, bv = lin(keys[2], d, d)
    wpq, bpq = lin(keys[3], d, d)   # PositionWiseWeightFactor.to_q
    wpk, bpk = lin(keys[4], d, d)   # PositionWiseWeightFactor.to_k
    wo, bo = lin(keys[5], d, d)
    w1, b1 = lin(keys[6], d, dff)   # FeedForward first linear
    w2, b2 = lin(keys[7], dff, d)   # FeedForward second linear
    ln1g = 1.0 + 0.1 * jax.random.normal(keys[8], (1, d), jnp.float32)
    ln1b = 0.1 * jax.random.normal(keys[9], (1, d), jnp.float32)
    ln2g = 1.0 + 0.1 * jax.random.normal(keys[10], (1, d), jnp.float32)
    ln2b = 0.1 * jax.random.normal(keys[11], (1, d), jnp.float32)
    return [ln1g, ln1b, wq, bq, wk, bk, wv, bv, wpq, bpq, wpk, bpk,
            wo, bo, ln2g, ln2b, w1, b1, w2, b2]


def reference(x, params):
    """Pure-JAX f32 reference of the PyTorch forward (eval mode)."""
    (ln1g, ln1b, wq, bq, wk, bk, wv, bv, wpq, bpq, wpk, bpk,
     wo, bo, ln2g, ln2b, w1, b1, w2, b2) = params
    B, N, L, D = x.shape
    H, dh = N_HEADS, D // N_HEADS
    scale = dh ** (-0.5)

    def ln(v, g, b):
        mu = v.mean(-1, keepdims=True)
        var = ((v - mu) ** 2).mean(-1, keepdims=True)
        return (v - mu) / jnp.sqrt(var + LN_EPS) * g + b

    lx = ln(x, ln1g, ln1b)
    q = (lx @ wq + bq).reshape(B, N, L, H, dh)
    k = (lx @ wk + bk).reshape(B, N, L, H, dh)
    v = (lx @ wv + bv).reshape(B, N, L, H, dh)
    qp = ((lx[:, 0] @ wpq + bpq) * scale).reshape(B, L, H, dh)
    kp = (lx @ wpk + bpk).reshape(B, N, L, H, dh)
    plog = jnp.einsum('blhd,bnlhd->bnlh', qp, kp)
    patt = jax.nn.softmax(plog, axis=1)                      # softmax over N
    q = q * patt[..., None] * scale
    logits = jnp.einsum('bnlhd,bnmhd->bhlm', q, k)
    att = jax.nn.softmax(logits, axis=-1)
    out = jnp.einsum('bhlm,bnmhd->bnlhd', att, v).reshape(B, N, L, D)
    out = out @ wo + bo
    x1 = x + out                                             # Residual(attention)
    l2 = ln(x1, ln2g, ln2b)
    ff = jnp.maximum(l2 @ w1 + b1, 0.0) @ w2 + b2
    return x1 + ff                                           # Residual(feed-forward)


if __name__ == "__main__":
    # TODO(synk): nn.Dropout in Residual is a no-op at inference and is not modeled.
    key = jax.random.PRNGKey(0)
    kx, kp = jax.random.split(key)
    B, N, L = 2, 4, 8
    x = jax.random.normal(kx, (B, N, L, D_MSA), jnp.float32)
    params = init_params(kp)

    out = encoder_layer(x, params)
    jax.block_until_ready(out)

    ref = reference(x, params)
    assert out.shape == (B, N, L, D_MSA)
    err = float(jnp.max(jnp.abs(out - ref)))
    if err < 2e-2:   # bf16-matmul (f32 accumulation) + approx-reciprocal tolerance
        print("KERNEL_OK")
    else:
        print("MISMATCH", err)
</pallas_src>

<mosaic_0001>
module attributes {stable_mosaic.version = 11 : i64} {
  func.func @_encoder_kernel(%arg0: i32, %arg1: memref<32x32xf32, #tpu.memory_space<vmem>>, %arg2: memref<32x288xbf16, #tpu.memory_space<vmem>>, %arg3: memref<64x32xbf16, #tpu.memory_space<vmem>>, %arg4: memref<8x256xf32, #tpu.memory_space<vmem>>, %arg5: memref<32x32xf32, #tpu.memory_space<vmem>>) attributes {dimension_semantics = [#tpu.dimension_semantics<parallel>], iteration_bounds = array<i64: 2>, scalar_prefetch = 0 : i64, scratch_operands = 0 : i64, tpu.core_type = #tpu.core_type<tc>, window_params = [{transform_indices = @transform_0, window_bounds = array<i64: 32, 32>}, {pipeline_mode = #tpu.pipeline_mode<synchronous>, transform_indices = @transform_1, window_bounds = array<i64: 32, 288>}, {pipeline_mode = #tpu.pipeline_mode<synchronous>, transform_indices = @transform_2, window_bounds = array<i64: 64, 32>}, {pipeline_mode = #tpu.pipeline_mode<synchronous>, transform_indices = @transform_3, window_bounds = array<i64: 8, 256>}, {transform_indices = @transform_4, window_bounds = array<i64: 32, 32>}]} {
    %c0 = arith.constant 0 : index
    %c0_0 = arith.constant 0 : index
    %0 = vector.load %arg1[%c0, %c0_0] : memref<32x32xf32, #tpu.memory_space<vmem>>, vector<32x32xf32>
    %c0_1 = arith.constant 0 : index
    %c0_2 = arith.constant 0 : index
    %1 = vector.load %arg2[%c0_1, %c0_2] : memref<32x288xbf16, #tpu.memory_space<vmem>>, vector<32x256xbf16>
    %c0_3 = arith.constant 0 : index
    %c160 = arith.constant 160 : index
    %2 = vector.load %arg2[%c0_3, %c160] : memref<32x288xbf16, #tpu.memory_space<vmem>>, vector<32x32xbf16>
    %c0_4 = arith.constant 0 : index
    %c192 = arith.constant 192 : index
    %3 = vector.load %arg2[%c0_4, %c192] : memref<32x288xbf16, #tpu.memory_space<vmem>>, vector<32x64xbf16>
    %c0_5 = arith.constant 0 : index
    %c256 = arith.constant 256 : index
    %4 = vector.load %arg2[%c0_5, %c256] : memref<32x288xbf16, #tpu.memory_space<vmem>>, vector<32x32xbf16>
    %c0_6 = arith.constant 0 : index
    %c0_7 = arith.constant 0 : index
    %5 = vector.load %arg3[%c0_6, %c0_7] : memref<64x32xbf16, #tpu.memory_space<vmem>>, vector<64x32xbf16>
    %c0_8 = arith.constant 0 : index
    %c0_9 = arith.constant 0 : index
    %6 = vector.load %arg4[%c0_8, %c0_9] : memref<8x256xf32, #tpu.memory_space<vmem>>, vector<1x32xf32>
    %c1 = arith.constant 1 : index
    %c0_10 = arith.constant 0 : index
    %7 = vector.load %arg4[%c1, %c0_10] : memref<8x256xf32, #tpu.memory_space<vmem>>, vector<1x32xf32>
    %c2 = arith.constant 2 : index
    %c0_11 = arith.constant 0 : index
    %8 = vector.load %arg4[%c2, %c0_11] : memref<8x256xf32, #tpu.memory_space<vmem>>, vector<1x32xf32>
    %c3 = arith.constant 3 : index
    %c0_12 = arith.constant 0 : index
    %9 = vector.load %arg4[%c3, %c0_12] : memref<8x256xf32, #tpu.memory_space<vmem>>, vector<1x32xf32>
    %c4 = arith.constant 4 : index
    %c0_13 = arith.constant 0 : index
    %10 = vector.load %arg4[%c4, %c0_13] : memref<8x256xf32, #tpu.memory_space<vmem>>, vector<1x32xf32>
    %c5 = arith.constant 5 : index
    %c0_14 = arith.constant 0 : index
    %11 = vector.load %arg4[%c5, %c0_14] : memref<8x256xf32, #tpu.memory_space<vmem>>, vector<1x32xf32>
    %c6 = arith.constant 6 : index
    %c0_15 = arith.constant 0 : index
    %12 = vector.load %arg4[%c6, %c0_15] : memref<8x256xf32, #tpu.memory_space<vmem>>, vector<1x64xf32>
    %c7 = arith.constant 7 : index
    %c0_16 = arith.constant 0 : index
    %13 = vector.load %arg4[%c7, %c0_16] : memref<8x256xf32, #tpu.memory_space<vmem>>, vector<1x256xf32>
    %cst = arith.constant dense<0.000000e+00> : vector<32xf32>
    %14 = vector.multi_reduction <add>, %0, %cst [1] : vector<32x32xf32> to vector<32xf32>
    %15 = vector.shape_cast %14 : vector<32xf32> to vector<32x1xf32>
    %cst_17 = arith.constant 3.200000e+01 : f32
    %16 = vector.broadcast %cst_17 : f32 to vector<32x1xf32>
    %17 = arith.divf %15, %16 : vector<32x1xf32>
    %18 = vector.broadcast %17 : vector<32x1xf32> to vector<32x32xf32>
    %19 = arith.subf %0, %18 : vector<32x32xf32>
    %20 = arith.mulf %19, %19 : vector<32x32xf32>
    %cst_18 = arith.constant dense<0.000000e+00> : vector<32xf32>
    %21 = vector.multi_reduction <add>, %20, %cst_18 [1] : vector<32x32xf32> to vector<32xf32>
    %22 = vector.shape_cast %21 : vector<32xf32> to vector<32x1xf32>
    %cst_19 = arith.constant 3.200000e+01 : f32
    %23 = vector.broadcast %cst_19 : f32 to vector<32x1xf32>
    %24 = arith.divf %22, %23 : vector<32x1xf32>
    %25 = vector.broadcast %17 : vector<32x1xf32> to vector<32x32xf32>
    %26 = arith.subf %0, %25 : vector<32x32xf32>
    %cst_20 = arith.constant 9.99999974E-6 : f32
    %27 = vector.broadcast %cst_20 : f32 to vector<32x1xf32>
    %28 = arith.addf %24, %27 : vector<32x1xf32>
    %29 = math.rsqrt %28 : vector<32x1xf32>
    %30 = vector.broadcast %29 : vector<32x1xf32> to vector<32x32xf32>
    %31 = arith.mulf %26, %30 : vector<32x32xf32>
    %32 = vector.broadcast %6 : vector<1x32xf32> to vector<32x32xf32>
    %33 = arith.mulf %31, %32 : vector<32x32xf32>
    %34 = vector.broadcast %7 : vector<1x32xf32> to vector<32x32xf32>
    %35 = arith.addf %33, %34 : vector<32x32xf32>
    %36 = arith.truncf %35 : vector<32x32xf32> to vector<32x32xbf16>
    %cst_21 = arith.constant dense<0.000000e+00> : vector<32x256xf32>
    %37 = tpu.matmul %36, %1, %cst_21 {dimension_numbers = #tpu.dot_dimension_numbers<[1], [0], [0], [1], [0, 0, 1, 1], [], []>} : vector<32x32xbf16>, vector<32x256xbf16>, vector<32x256xf32> -> vector<32x256xf32>
    %38 = vector.broadcast %13 : vector<1x256xf32> to vector<32x256xf32>
    %39 = arith.addf %37, %38 : vector<32x256xf32>
    %40 = vector.extract_strided_slice %39 {offsets = [0, 0], sizes = [32, 32], strides = [1, 1]} : vector<32x256xf32> to vector<32x32xf32>
    %41 = vector.extract_strided_slice %39 {offsets = [0, 32], sizes = [32, 32], strides = [1, 1]} : vector<32x256xf32> to vector<32x32xf32>
    %42 = vector.extract_strided_slice %39 {offsets = [0, 64], sizes = [32, 32], strides = [1, 1]} : vector<32x256xf32> to vector<32x32xf32>
    %43 = vector.extract_strided_slice %39 {offsets = [0, 96], sizes = [32, 32], strides = [1, 1]} : vector<32x256xf32> to vector<32x32xf32>
    %44 = vector.extract_strided_slice %39 {offsets = [0, 128], sizes = [32, 32], strides = [1, 1]} : vector<32x256xf32> to vector<32x32xf32>
    %45 = vector.shape_cast %43 : vector<32x32xf32> to vector<1x4x8x32xf32>
    %46 = vector.shape_cast %44 : vector<32x32xf32> to vector<1x4x8x32xf32>
    %47 = vector.extract_strided_slice %45 {offsets = [0, 0, 0, 0], sizes = [1, 1, 8, 32], strides = [1, 1, 1, 1]} : vector<1x4x8x32xf32> to vector<1x1x8x32xf32>
    %48 = vector.broadcast %47 : vector<1x1x8x32xf32> to vector<1x4x8x32xf32>
    %49 = arith.mulf %48, %46 : vector<1x4x8x32xf32>
    %50 = vector.shape_cast %49 : vector<1x4x8x32xf32> to vector<32x32xf32>
    %51 = arith.truncf %50 : vector<32x32xf32> to vector<32x32xbf16>
    %cst_22 = arith.constant dense<0.000000e+00> : vector<32x32xf32>
    %52 = tpu.matmul %51, %4, %cst_22 {dimension_numbers = #tpu.dot_dimension_numbers<[1], [0], [0], [1], [0, 0, 1, 1], [], []>} : vector<32x32xbf16>, vector<32x32xbf16>, vector<32x32xf32> -> vector<32x32xf32>
    %53 = vector.shape_cast %52 : vector<32x32xf32> to vector<1x4x8x32xf32>
    %cst_23 = arith.constant dense<0xFF800000> : vector<1x8x32xf32>
    %54 = vector.multi_reduction <maximumf>, %53, %cst_23 [1] : vector<1x4x8x32xf32> to vector<1x8x32xf32>
    %55 = vector.shape_cast %54 : vector<1x8x32xf32> to vector<1x1x8x32xf32>
    %56 = vector.broadcast %55 : vector<1x1x8x32xf32> to vector<1x4x8x32xf32>
    %57 = arith.subf %53, %56 : vector<1x4x8x32xf32>
    %58 = math.exp %57 : vector<1x4x8x32xf32>
    %cst_24 = arith.constant dense<0.000000e+00> : vector<1x8x32xf32>
    %59 = vector.multi_reduction <add>, %58, %cst_24 [1] : vector<1x4x8x32xf32> to vector<1x8x32xf32>
    %60 = vector.shape_cast %59 : vector<1x8x32xf32> to vector<1x1x8x32xf32>
    %61 = tpu.reciprocal %60 {approx = true} : vector<1x1x8x32xf32> -> vector<1x1x8x32xf32>
    %62 = vector.broadcast %61 : vector<1x1x8x32xf32> to vector<1x4x8x32xf32>
    %63 = arith.mulf %58, %62 : vector<1x4x8x32xf32>
    %64 = vector.shape_cast %63 : vector<1x4x8x32xf32> to vector<32x32xf32>
    %65 = arith.mulf %40, %64 : vector<32x32xf32>
    %66 = vector.extract_strided_slice %65 {offsets = [0, 0], sizes = [32, 8], strides = [1, 1]} : vector<32x32xf32> to vector<32x8xf32>
    %67 = vector.shape_cast %66 : vector<32x8xf32> to vector<1x4x8x8xf32>
    %68 = vector.extract_strided_slice %41 {offsets = [0, 0], sizes = [32, 8], strides = [1, 1]} : vector<32x32xf32> to vector<32x8xf32>
    %69 = vector.shape_cast %68 : vector<32x8xf32> to vector<1x4x8x8xf32>
    %70 = vector.extract_strided_slice %42 {offsets = [0, 0], sizes = [32, 8], strides = [1, 1]} : vector<32x32xf32> to vector<32x8xf32>
    %71 = vector.shape_cast %70 : vector<32x8xf32> to vector<1x4x8x8xf32>
    %72 = vector.extract_strided_slice %67 {offsets = [0, 0, 0, 0], sizes = [1, 1, 8, 8], strides = [1, 1, 1, 1]} : vector<1x4x8x8xf32> to vector<1x1x8x8xf32>
    %73 = vector.shape_cast %72 : vector<1x1x8x8xf32> to vector<1x8x8xf32>
    %74 = vector.extract_strided_slice %67 {offsets = [0, 1, 0, 0], sizes = [1, 1, 8, 8], strides = [1, 1, 1, 1]} : vector<1x4x8x8xf32> to vector<1x1x8x8xf32>
    %75 = vector.shape_cast %74 : vector<1x1x8x8xf32> to vector<1x8x8xf32>
    %76 = vector.extract_strided_slice %67 {offsets = [0, 2, 0, 0], sizes = [1, 1, 8, 8], strides = [1, 1, 1, 1]} : vector<1x4x8x8xf32> to vector<1x1x8x8xf32>
    %77 = vector.shape_cast %76 : vector<1x1x8x8xf32> to vector<1x8x8xf32>
    %78 = vector.extract_strided_slice %67 {offsets = [0, 3, 0, 0], sizes = [1, 1, 8, 8], strides = [1, 1, 1, 1]} : vector<1x4x8x8xf32> to vector<1x1x8x8xf32>
    %79 = vector.shape_cast %78 : vector<1x1x8x8xf32> to vector<1x8x8xf32>
    %80 = tpu.concatenate %73, %75, %77, %79 in 2 : vector<1x8x8xf32>, vector<1x8x8xf32>, vector<1x8x8xf32>, vector<1x8x8xf32> -> vector<1x8x32xf32>
    %81 = arith.truncf %80 : vector<1x8x32xf32> to vector<1x8x32xbf16>
    %82 = vector.extract_strided_slice %69 {offsets = [0, 0, 0, 0], sizes = [1, 1, 8, 8], strides = [1, 1, 1, 1]} : vector<1x4x8x8xf32> to vector<1x1x8x8xf32>
    %83 = vector.shape_cast %82 : vector<1x1x8x8xf32> to vector<1x8x8xf32>
    %84 = vector.extract_strided_slice %69 {offsets = [0, 1, 0, 0], sizes = [1, 1, 8, 8], strides = [1, 1, 1, 1]} : vector<1x4x8x8xf32> to vector<1x1x8x8xf32>
    %85 = vector.shape_cast %84 : vector<1x1x8x8xf32> to vector<1x8x8xf32>
    %86 = vector.extract_strided_slice %69 {offsets = [0, 2, 0, 0], sizes = [1, 1, 8, 8], strides = [1, 1, 1, 1]} : vector<1x4x8x8xf32> to vector<1x1x8x8xf32>
    %87 = vector.shape_cast %86 : vector<1x1x8x8xf32> to vector<1x8x8xf32>
    %88 = vector.extract_strided_slice %69 {offsets = [0, 3, 0, 0], sizes = [1, 1, 8, 8], strides = [1, 1, 1, 1]} : vector<1x4x8x8xf32> to vector<1x1x8x8xf32>
    %89 = vector.shape_cast %88 : vector<1x1x8x8xf32> to vector<1x8x8xf32>
    %90 = tpu.concatenate %83, %85, %87, %89 in 2 : vector<1x8x8xf32>, vector<1x8x8xf32>, vector<1x8x8xf32>, vector<1x8x8xf32> -> vector<1x8x32xf32>
    %91 = arith.truncf %90 : vector<1x8x32xf32> to vector<1x8x32xbf16>
    %92 = vector.extract_strided_slice %71 {offsets = [0, 0, 0, 0], sizes = [1, 1, 8, 8], strides = [1, 1, 1, 1]} : vector<1x4x8x8xf32> to vector<1x1x8x8xf32>
    %93 = vector.shape_cast %92 : vector<1x1x8x8xf32> to vector<1x8x8xf32>
    %94 = vector.extract_strided_slice %71 {offsets = [0, 1, 0, 0], sizes = [1, 1, 8, 8], strides = [1, 1, 1, 1]} : vector<1x4x8x8xf32> to vector<1x1x8x8xf32>
    %95 = vector.shape_cast %94 : vector<1x1x8x8xf32> to vector<1x8x8xf32>
    %96 = vector.extract_strided_slice %71 {offsets = [0, 2, 0, 0], sizes = [1, 1, 8, 8], strides = [1, 1, 1, 1]} : vector<1x4x8x8xf32> to vector<1x1x8x8xf32>
    %97 = vector.shape_cast %96 : vector<1x1x8x8xf32> to vector<1x8x8xf32>
    %98 = vector.extract_strided_slice %71 {offsets = [0, 3, 0, 0], sizes = [1, 1, 8, 8], strides = [1, 1, 1, 1]} : vector<1x4x8x8xf32> to vector<1x1x8x8xf32>
    %99 = vector.shape_cast %98 : vector<1x1x8x8xf32> to vector<1x8x8xf32>
    %100 = tpu.concatenate %93, %95, %97, %99 in 2 : vector<1x8x8xf32>, vector<1x8x8xf32>, vector<1x8x8xf32>, vector<1x8x8xf32> -> vector<1x8x32xf32>
    %101 = arith.truncf %100 : vector<1x8x32xf32> to vector<1x8x32xbf16>
    "tpu.trace_start"() <{level = 10 : i32, message = "blk,bmk->blm"}> : () -> ()
    %cst_25 = arith.constant dense<0.000000e+00> : vector<1x8x8xf32>
    %102 = tpu.matmul %81, %91, %cst_25 {dimension_numbers = #tpu.dot_dimension_numbers<[2], [2], [1], [1], [0, 0, 0, 1, 1, 1], [0], [0]>} : vector<1x8x32xbf16>, vector<1x8x32xbf16>, vector<1x8x8xf32> -> vector<1x8x8xf32>
    "tpu.trace_stop"() : () -> ()
    %cst_26 = arith.constant dense<0xFF800000> : vector<1x8xf32>
    %103 = vector.multi_reduction <maximumf>, %102, %cst_26 [2] : vector<1x8x8xf32> to vector<1x8xf32>
    %104 = vector.shape_cast %103 : vector<1x8xf32> to vector<1x8x1xf32>
    %105 = vector.broadcast %104 : vector<1x8x1xf32> to vector<1x8x8xf32>
    %106 = arith.subf %102, %105 : vector<1x8x8xf32>
    %107 = math.exp %106 : vector<1x8x8xf32>
    %cst_27 = arith.constant dense<0.000000e+00> : vector<1x8xf32>
    %108 = vector.multi_reduction <add>, %107, %cst_27 [2] : vector<1x8x8xf32> to vector<1x8xf32>
    %109 = vector.shape_cast %108 : vector<1x8xf32> to vector<1x8x1xf32>
    %110 = tpu.reciprocal %109 {approx = true} : vector<1x8x1xf32> -> vector<1x8x1xf32>
    %111 = vector.broadcast %110 : vector<1x8x1xf32> to vector<1x8x8xf32>
    %112 = arith.mulf %107, %111 : vector<1x8x8xf32>
    %113 = arith.truncf %112 : vector<1x8x8xf32> to vector<1x8x8xbf16>
    "tpu.trace_start"() <{level = 10 : i32, message = "blm,bmk->blk"}> : () -> ()
    %cst_28 = arith.constant dense<0.000000e+00> : vector<1x8x32xf32>
    %114 = tpu.matmul %113, %101, %cst_28 {dimension_numbers = #tpu.dot_dimension_numbers<[2], [1], [1], [2], [0, 0, 0, 1, 1, 2], [0], [0]>} : vector<1x8x8xbf16>, vector<1x8x32xbf16>, vector<1x8x32xf32> -> vector<1x8x32xf32>
    "tpu.trace_stop"() : () -> ()
    %115 = vector.extract_strided_slice %114 {offsets = [0, 0, 0], sizes = [1, 8, 8], strides = [1, 1, 1]} : vector<1x8x32xf32> to vector<1x8x8xf32>
    %116 = vector.extract_strided_slice %114 {offsets = [0, 0, 8], sizes = [1, 8, 8], strides = [1, 1, 1]} : vector<1x8x32xf32> to vector<1x8x8xf32>
    %117 = vector.extract_strided_slice %114 {offsets = [0, 0, 16], sizes = [1, 8, 8], strides = [1, 1, 1]} : vector<1x8x32xf32> to vector<1x8x8xf32>
    %118 = vector.extract_strided_slice %114 {offsets = [0, 0, 24], sizes = [1, 8, 8], strides = [1, 1, 1]} : vector<1x8x32xf32> to vector<1x8x8xf32>
    %119 = vector.shape_cast %115 : vector<1x8x8xf32> to vector<1x1x8x8xf32>
    %120 = vector.shape_cast %116 : vector<1x8x8xf32> to vector<1x1x8x8xf32>
    %121 = vector.shape_cast %117 : vector<1x8x8xf32> to vector<1x1x8x8xf32>
    %122 = vector.shape_cast %118 : vector<1x8x8xf32> to vector<1x1x8x8xf32>
    %123 = tpu.concatenate %119, %120, %121, %122 in 1 : vector<1x1x8x8xf32>, vector<1x1x8x8xf32>, vector<1x1x8x8xf32>, vector<1x1x8x8xf32> -> vector<1x4x8x8xf32>
    %124 = vector.shape_cast %123 : vector<1x4x8x8xf32> to vector<32x8xf32>
    %125 = vector.extract_strided_slice %65 {offsets = [0, 8], sizes = [32, 8], strides = [1, 1]} : vector<32x32xf32> to vector<32x8xf32>
    %126 = vector.shape_cast %125 : vector<32x8xf32> to vector<1x4x8x8xf32>
    %127 = vector.extract_strided_slice %41 {offsets = [0, 8], sizes = [32, 8], strides = [1, 1]} : vector<32x32xf32> to vector<32x8xf32>
    %128 = vector.shape_cast %127 : vector<32x8xf32> to vector<1x4x8x8xf32>
    %129 = vector.extract_strided_slice %42 {offsets = [0, 8], sizes = [32, 8], strides = [1, 1]} : vector<32x32xf32> to vector<32x8xf32>
    %130 = vector.shape_cast %129 : vector<32x8xf32> to vector<1x4x8x8xf32>
    %131 = vector.extract_strided_slice %126 {offsets = [0, 0, 0, 0], sizes = [1, 1, 8, 8], strides = [1, 1, 1, 1]} : vector<1x4x8x8xf32> to vector<1x1x8x8xf32>
    %132 = vector.shape_cast %131 : vector<1x1x8x8xf32> to vector<1x8x8xf32>
    %133 = vector.extract_strided_slice %126 {offsets = [0, 1, 0, 0], sizes = [1, 1, 8, 8], strides = [1, 1, 1, 1]} : vector<1x4x8x8xf32> to vector<1x1x8x8xf32>
    %134 = vector.shape_cast %133 : vector<1x1x8x8xf32> to vector<1x8x8xf32>
    %135 = vector.extract_strided_slice %126 {offsets = [0, 2, 0, 0], sizes = [1, 1, 8, 8], strides = [1, 1, 1, 1]} : vector<1x4x8x8xf32> to vector<1x1x8x8xf32>
    %136 = vector.shape_cast %135 : vector<1x1x8x8xf32> to vector<1x8x8xf32>
    %137 = vector.extract_strided_slice %126 {offsets = [0, 3, 0, 0], sizes = [1, 1, 8, 8], strides = [1, 1, 1, 1]} : vector<1x4x8x8xf32> to vector<1x1x8x8xf32>
    %138 = vector.shape_cast %137 : vector<1x1x8x8xf32> to vector<1x8x8xf32>
    %139 = tpu.concatenate %132, %134, %136, %138 in 2 : vector<1x8x8xf32>, vector<1x8x8xf32>, vector<1x8x8xf32>, vector<1x8x8xf32> -> vector<1x8x32xf32>
    %140 = arith.truncf %139 : vector<1x8x32xf32> to vector<1x8x32xbf16>
    %141 = vector.extract_strided_slice %128 {offsets = [0, 0, 0, 0], sizes = [1, 1, 8, 8], strides = [1, 1, 1, 1]} : vector<1x4x8x8xf32> to vector<1x1x8x8xf32>
    %142 = vector.shape_cast %141 : vector<1x1x8x8xf32> to vector<1x8x8xf32>
    %143 = vector.extract_strided_slice %128 {offsets = [0, 1, 0, 0], sizes = [1, 1, 8, 8], strides = [1, 1, 1, 1]} : vector<1x4x8x8xf32> to vector<1x1x8x8xf32>
    %144 = vector.shape_cast %143 : vector<1x1x8x8xf32> to vector<1x8x8xf32>
    %145 = vector.extract_strided_slice %128 {offsets = [0, 2, 0, 0], sizes = [1, 1, 8, 8], strides = [1, 1, 1, 1]} : vector<1x4x8x8xf32> to vector<1x1x8x8xf32>
    %146 = vector.shape_cast %145 : vector<1x1x8x8xf32> to vector<1x8x8xf32>
    %147 = vector.extract_strided_slice %128 {offsets = [0, 3, 0, 0], sizes = [1, 1, 8, 8], strides = [1, 1, 1, 1]} : vector<1x4x8x8xf32> to vector<1x1x8x8xf32>
    %148 = vector.shape_cast %147 : vector<1x1x8x8xf32> to vector<1x8x8xf32>
    %149 = tpu.concatenate %142, %144, %146, %148 in 2 : vector<1x8x8xf32>, vector<1x8x8xf32>, vector<1x8x8xf32>, vector<1x8x8xf32> -> vector<1x8x32xf32>
    %150 = arith.truncf %149 : vector<1x8x32xf32> to vector<1x8x32xbf16>
    %151 = vector.extract_strided_slice %130 {offsets = [0, 0, 0, 0], sizes = [1, 1, 8, 8], strides = [1, 1, 1, 1]} : vector<1x4x8x8xf32> to vector<1x1x8x8xf32>
    %152 = vector.shape_cast %151 : vector<1x1x8x8xf32> to vector<1x8x8xf32>
    %153 = vector.extract_strided_slice %130 {offsets = [0, 1, 0, 0], sizes = [1, 1, 8, 8], strides = [1, 1, 1, 1]} : vector<1x4x8x8xf32> to vector<1x1x8x8xf32>
    %154 = vector.shape_cast %153 : vector<1x1x8x8xf32> to vector<1x8x8xf32>
    %155 = vector.extract_strided_slice %130 {offsets = [0, 2, 0, 0], sizes = [1, 1, 8, 8], strides = [1, 1, 1, 1]} : vector<1x4x8x8xf32> to vector<1x1x8x8xf32>
    %156 = vector.shape_cast %155 : vector<1x1x8x8xf32> to vector<1x8x8xf32>
    %157 = vector.extract_strided_slice %130 {offsets = [0, 3, 0, 0], sizes = [1, 1, 8, 8], strides = [1, 1, 1, 1]} : vector<1x4x8x8xf32> to vector<1x1x8x8xf32>
    %158 = vector.shape_cast %157 : vector<1x1x8x8xf32> to vector<1x8x8xf32>
    %159 = tpu.concatenate %152, %154, %156, %158 in 2 : vector<1x8x8xf32>, vector<1x8x8xf32>, vector<1x8x8xf32>, vector<1x8x8xf32> -> vector<1x8x32xf32>
    %160 = arith.truncf %159 : vector<1x8x32xf32> to vector<1x8x32xbf16>
    "tpu.trace_start"() <{level = 10 : i32, message = "blk,bmk->blm"}> : () -> ()
    %cst_29 = arith.constant dense<0.000000e+00> : vector<1x8x8xf32>
    %161 = tpu.matmul %140, %150, %cst_29 {dimension_numbers = #tpu.dot_dimension_numbers<[2], [2], [1], [1], [0, 0, 0, 1, 1, 1], [0], [0]>} : vector<1x8x32xbf16>, vector<1x8x32xbf16>, vector<1x8x8xf32> -> vector<1x8x8xf32>
    "tpu.trace_stop"() : () -> ()
    %cst_30 = arith.constant dense<0xFF800000> : vector<1x8xf32>
    %162 = vector.multi_reduction <maximumf>, %161, %cst_30 [2] : vector<1x8x8xf32> to vector<1x8xf32>
    %163 = vector.shape_cast %162 : vector<1x8xf32> to vector<1x8x1xf32>
    %164 = vector.broadcast %163 : vector<1x8x1xf32> to vector<1x8x8xf32>
    %165 = arith.subf %161, %164 : vector<1x8x8xf32>
    %166 = math.exp %165 : vector<1x8x8xf32>
    %cst_31 = arith.constant dense<0.000000e+00> : vector<1x8xf32>
    %167 = vector.multi_reduction <add>, %166, %cst_31 [2] : vector<1x8x8xf32> to vector<1x8xf32>
    %168 = vector.shape_cast %167 : vector<1x8xf32> to vector<1x8x1xf32>
    %169 = tpu.reciprocal %168 {approx = true} : vector<1x8x1xf32> -> vector<1x8x1xf32>
    %170 = vector.broadcast %169 : vector<1x8x1xf32> to vector<1x8x8xf32>
    %171 = arith.mulf %166, %170 : vector<1x8x8xf32>
    %172 = arith.truncf %171 : vector<1x8x8xf32> to vector<1x8x8xbf16>
    "tpu.trace_start"() <{level = 10 : i32, message = "blm,bmk->blk"}> : () -> ()
    %cst_32 = arith.constant dense<0.000000e+00> : vector<1x8x32xf32>
    %173 = tpu.matmul %172, %160, %cst_32 {dimension_numbers = #tpu.dot_dimension_numbers<[2], [1], [1], [2], [0, 0, 0, 1, 1, 2], [0], [0]>} : vector<1x8x8xbf16>, vector<1x8x32xbf16>, vector<1x8x32xf32> -> vector<1x8x32xf32>
    "tpu.trace_stop"() : () -> ()
    %174 = vector.extract_strided_slice %173 {offsets = [0, 0, 0], sizes = [1, 8, 8], strides = [1, 1, 1]} : vector<1x8x32xf32> to vector<1x8x8xf32>
    %175 = vector.extract_strided_slice %173 {offsets = [0, 0, 8], sizes = [1, 8, 8], strides = [1, 1, 1]} : vector<1x8x32xf32> to vector<1x8x8xf32>
    %176 = vector.extract_strided_slice %173 {offsets = [0, 0, 16], sizes = [1, 8, 8], strides = [1, 1, 1]} : vector<1x8x32xf32> to vector<1x8x8xf32>
    %177 = vector.extract_strided_slice %173 {offsets = [0, 0, 24], sizes = [1, 8, 8], strides = [1, 1, 1]} : vector<1x8x32xf32> to vector<1x8x8xf32>
    %178 = vector.shape_cast %174 : vector<1x8x8xf32> to vector<1x1x8x8xf32>
    %179 = vector.shape_cast %175 : vector<1x8x8xf32> to vector<1x1x8x8xf32>
    %180 = vector.shape_cast %176 : vector<1x8x8xf32> to vector<1x1x8x8xf32>
    %181 = vector.shape_cast %177 : vector<1x8x8xf32> to vector<1x1x8x8xf32>
    %182 = tpu.concatenate %178, %179, %180, %181 in 1 : vector<1x1x8x8xf32>, vector<1x1x8x8xf32>, vector<1x1x8x8xf32>, vector<1x1x8x8xf32> -> vector<1x4x8x8xf32>
    %183 = vector.shape_cast %182 : vector<1x4x8x8xf32> to vector<32x8xf32>
    %184 = vector.extract_strided_slice %65 {offsets = [0, 16], sizes = [32, 8], strides = [1, 1]} : vector<32x32xf32> to vector<32x8xf32>
    %185 = vector.shape_cast %184 : vector<32x8xf32> to vector<1x4x8x8xf32>
    %186 = vector.extract_strided_slice %41 {offsets = [0, 16], sizes = [32, 8], strides = [1, 1]} : vector<32x32xf32> to vector<32x8xf32>
    %187 = vector.shape_cast %186 : vector<32x8xf32> to vector<1x4x8x8xf32>
    %188 = vector.extract_strided_slice %42 {offsets = [0, 16], sizes = [32, 8], strides = [1, 1]} : vector<32x32xf32> to vector<32x8xf32>
    %189 = vector.shape_cast %188 : vector<32x8xf32> to vector<1x4x8x8xf32>
    %190 = vector.extract_strided_slice %185 {offsets = [0, 0, 0, 0], sizes = [1, 1, 8, 8], strides = [1, 1, 1, 1]} : vector<1x4x8x8xf32> to vector<1x1x8x8xf32>
    %191 = vector.shape_cast %190 : vector<1x1x8x8xf32> to vector<1x8x8xf32>
    %192 = vector.extract_strided_slice %185 {offsets = [0, 1, 0, 0], sizes = [1, 1, 8, 8], strides = [1, 1, 1, 1]} : vector<1x4x8x8xf32> to vector<1x1x8x8xf32>
    %193 = vector.shape_cast %192 : vector<1x1x8x8xf32> to vector<1x8x8xf32>
    %194 = vector.extract_strided_slice %185 {offsets = [0, 2, 0, 0], sizes = [1, 1, 8, 8], strides = [1, 1, 1, 1]} : vector<1x4x8x8xf32> to vector<1x1x8x8xf32>
    %195 = vector.shape_cast %194 : vector<1x1x8x8xf32> to vector<1x8x8xf32>
    %196 = vector.extract_strided_slice %185 {offsets = [0, 3, 0, 0], sizes = [1, 1, 8, 8], strides = [1, 1, 1, 1]} : vector<1x4x8x8xf32> to vector<1x1x8x8xf32>
    %197 = vector.shape_cast %196 : vector<1x1x8x8xf32> to vector<1x8x8xf32>
    %198 = tpu.concatenate %191, %193, %195, %197 in 2 : vector<1x8x8xf32>, vector<1x8x8xf32>, vector<1x8x8xf32>, vector<1x8x8xf32> -> vector<1x8x32xf32>
    %199 = arith.truncf %198 : vector<1x8x32xf32> to vector<1x8x32xbf16>
    %200 = vector.extract_strided_slice %187 {offsets = [0, 0, 0, 0], sizes = [1, 1, 8, 8], strides = [1, 1, 1, 1]} : vector<1x4x8x8xf32> to vector<1x1x8x8xf32>
    %201 = vector.shape_cast %200 : vector<1x1x8x8xf32> to vector<1x8x8xf32>
    %202 = vector.extract_strided_slice %187 {offsets = [0, 1, 0, 0], sizes = [1, 1, 8, 8], strides = [1, 1, 1, 1]} : vector<1x4x8x8xf32> to vector<1x1x8x8xf32>
    %203 = vector.shape_cast %202 : vector<1x1x8x8xf32> to vector<1x8x8xf32>
    %204 = vector.extract_strided_slice %187 {offsets = [0, 2, 0, 0], sizes = [1, 1, 8, 8], strides = [1, 1, 1, 1]} : vector<1x4x8x8xf32> to vector<1x1x8x8xf32>
    %205 = vector.shape_cast %204 : vector<1x1x8x8xf32> to vector<1x8x8xf32>
    %206 = vector.extract_strided_slice %187 {offsets = [0, 3, 0, 0], sizes = [1, 1, 8, 8], strides = [1, 1, 1, 1]} : vector<1x4x8x8xf32> to vector<1x1x8x8xf32>
    %207 = vector.shape_cast %206 : vector<1x1x8x8xf32> to vector<1x8x8xf32>
    %208 = tpu.concatenate %201, %203, %205, %207 in 2 : vector<1x8x8xf32>, vector<1x8x8xf32>, vector<1x8x8xf32>, vector<1x8x8xf32> -> vector<1x8x32xf32>
    %209 = arith.truncf %208 : vector<1x8x32xf32> to vector<1x8x32xbf16>
    %210 = vector.extract_strided_slice %189 {offsets = [0, 0, 0, 0], sizes = [1, 1, 8, 8], strides = [1, 1, 1, 1]} : vector<1x4x8x8xf32> to vector<1x1x8x8xf32>
    %211 = vector.shape_cast %210 : vector<1x1x8x8xf32> to vector<1x8x8xf32>
    %212 = vector.extract_strided_slice %189 {offsets = [0, 1, 0, 0], sizes = [1, 1, 8, 8], strides = [1, 1, 1, 1]} : vector<1x4x8x8xf32> to vector<1x1x8x8xf32>
    %213 = vector.shape_cast %212 : vector<1x1x8x8xf32> to vector<1x8x8xf32>
    %214 = vector.extract_strided_slice %189 {offsets = [0, 2, 0, 0], sizes = [1, 1, 8, 8], strides = [1, 1, 1, 1]} : vector<1x4x8x8xf32> to vector<1x1x8x8xf32>
    %215 = vector.shape_cast %214 : vector<1x1x8x8xf32> to vector<1x8x8xf32>
    %216 = vector.extract_strided_slice %189 {offsets = [0, 3, 0, 0], sizes = [1, 1, 8, 8], strides = [1, 1, 1, 1]} : vector<1x4x8x8xf32> to vector<1x1x8x8xf32>
    %217 = vector.shape_cast %216 : vector<1x1x8x8xf32> to vector<1x8x8xf32>
    %218 = tpu.concatenate %211, %213, %215, %217 in 2 : vector<1x8x8xf32>, vector<1x8x8xf32>, vector<1x8x8xf32>, vector<1x8x8xf32> -> vector<1x8x32xf32>
    %219 = arith.truncf %218 : vector<1x8x32xf32> to vector<1x8x32xbf16>
    "tpu.trace_start"() <{level = 10 : i32, message = "blk,bmk->blm"}> : () -> ()
    %cst_33 = arith.constant dense<0.000000e+00> : vector<1x8x8xf32>
    %220 = tpu.matmul %199, %209, %cst_33 {dimension_numbers = #tpu.dot_dimension_numbers<[2], [2], [1], [1], [0, 0, 0, 1, 1, 1], [0], [0]>} : vector<1x8x32xbf16>, vector<1x8x32xbf16>, vector<1x8x8xf32> -> vector<1x8x8xf32>
    "tpu.trace_stop"() : () -> ()
    %cst_34 = arith.constant dense<0xFF800000> : vector<1x8xf32>
    %221 = vector.multi_reduction <maximumf>, %220, %cst_34 [2] : vector<1x8x8xf32> to vector<1x8xf32>
    %222 = vector.shape_cast %221 : vector<1x8xf32> to vector<1x8x1xf32>
    %223 = vector.broadcast %222 : vector<1x8x1xf32> to vector<1x8x8xf32>
    %224 = arith.subf %220, %223 : vector<1x8x8xf32>
    %225 = math.exp %224 : vector<1x8x8xf32>
    %cst_35 = arith.constant dense<0.000000e+00> : vector<1x8xf32>
    %226 = vector.multi_reduction <add>, %225, %cst_35 [2] : vector<1x8x8xf32> to vector<1x8xf32>
    %227 = vector.shape_cast %226 : vector<1x8xf32> to vector<1x8x1xf32>
    %228 = tpu.reciprocal %227 {approx = true} : vector<1x8x1xf32> -> vector<1x8x1xf32>
    %229 = vector.broadcast %228 : vector<1x8x1xf32> to vector<1x8x8xf32>
    %230 = arith.mulf %225, %229 : vector<1x8x8xf32>
    %231 = arith.truncf %230 : vector<1x8x8xf32> to vector<1x8x8xbf16>
    "tpu.trace_start"() <{level = 10 : i32, message = "blm,bmk->blk"}> : () -> ()
    %cst_36 = arith.constant dense<0.000000e+00> : vector<1x8x32xf32>
    %232 = tpu.matmul %231, %219, %cst_36 {dimension_numbers = #tpu.dot_dimension_numbers<[2], [1], [1], [2], [0, 0, 0, 1, 1, 2], [0], [0]>} : vector<1x8x8xbf16>, vector<1x8x32xbf16>, vector<1x8x32xf32> -> vector<1x8x32xf32>
    "tpu.trace_stop"() : () -> ()
    %233 = vector.extract_strided_slice %232 {offsets = [0, 0, 0], sizes = [1, 8, 8], strides = [1, 1, 1]} : vector<1x8x32xf32> to vector<1x8x8xf32>
    %234 = vector.extract_strided_slice %232 {offsets = [0, 0, 8], sizes = [1, 8, 8], strides = [1, 1, 1]} : vector<1x8x32xf32> to vector<1x8x8xf32>
    %235 = vector.extract_strided_slice %232 {offsets = [0, 0, 16], sizes = [1, 8, 8], strides = [1, 1, 1]} : vector<1x8x32xf32> to vector<1x8x8xf32>
    %236 = vector.extract_strided_slice %232 {offsets = [0, 0, 24], sizes = [1, 8, 8], strides = [1, 1, 1]} : vector<1x8x32xf32> to vector<1x8x8xf32>
    %237 = vector.shape_cast %233 : vector<1x8x8xf32> to vector<1x1x8x8xf32>
    %238 = vector.shape_cast %234 : vector<1x8x8xf32> to vector<1x1x8x8xf32>
    %239 = vector.shape_cast %235 : vector<1x8x8xf32> to vector<1x1x8x8xf32>
    %240 = vector.shape_cast %236 : vector<1x8x8xf32> to vector<1x1x8x8xf32>
    %241 = tpu.concatenate %237, %238, %239, %240 in 1 : vector<1x1x8x8xf32>, vector<1x1x8x8xf32>, vector<1x1x8x8xf32>, vector<1x1x8x8xf32> -> vector<1x4x8x8xf32>
    %242 = vector.shape_cast %241 : vector<1x4x8x8xf32> to vector<32x8xf32>
    %243 = vector.extract_strided_slice %65 {offsets = [0, 24], sizes = [32, 8], strides = [1, 1]} : vector<32x32xf32> to vector<32x8xf32>
    %244 = vector.shape_cast %243 : vector<32x8xf32> to vector<1x4x8x8xf32>
    %245 = vector.extract_strided_slice %41 {offsets = [0, 24], sizes = [32, 8], strides = [1, 1]} : vector<32x32xf32> to vector<32x8xf32>
    %246 = vector.shape_cast %245 : vector<32x8xf32> to vector<1x4x8x8xf32>
    %247 = vector.extract_strided_slice %42 {offsets = [0, 24], sizes = [32, 8], strides = [1, 1]} : vector<32x32xf32> to vector<32x8xf32>
    %248 = vector.shape_cast %247 : vector<32x8xf32> to vector<1x4x8x8xf32>
    %249 = vector.extract_strided_slice %244 {offsets = [0, 0, 0, 0], sizes = [1, 1, 8, 8], strides = [1, 1, 1, 1]} : vector<1x4x8x8xf32> to vector<1x1x8x8xf32>
    %250 = vector.shape_cast %249 : vector<1x1x8x8xf32> to vector<1x8x8xf32>
    %251 = vector.extract_strided_slice %244 {offsets = [0, 1, 0, 0], sizes = [1, 1, 8, 8], strides = [1, 1, 1, 1]} : vector<1x4x8x8xf32> to vector<1x1x8x8xf32>
    %252 = vector.shape_cast %251 : vector<1x1x8x8xf32> to vector<1x8x8xf32>
    %253 = vector.extract_strided_slice %244 {offsets = [0, 2, 0, 0], sizes = [1, 1, 8, 8], strides = [1, 1, 1, 1]} : vector<1x4x8x8xf32> to vector<1x1x8x8xf32>
    %254 = vector.shape_cast %253 : vector<1x1x8x8xf32> to vector<1x8x8xf32>
    %255 = vector.extract_strided_slice %244 {offsets = [0, 3, 0, 0], sizes = [1, 1, 8, 8], strides = [1, 1, 1, 1]} : vector<1x4x8x8xf32> to vector<1x1x8x8xf32>
    %256 = vector.shape_cast %255 : vector<1x1x8x8xf32> to vector<1x8x8xf32>
    %257 = tpu.concatenate %250, %252, %254, %256 in 2 : vector<1x8x8xf32>, vector<1x8x8xf32>, vector<1x8x8xf32>, vector<1x8x8xf32> -> vector<1x8x32xf32>
    %258 = arith.truncf %257 : vector<1x8x32xf32> to vector<1x8x32xbf16>
    %259 = vector.extract_strided_slice %246 {offsets = [0, 0, 0, 0], sizes = [1, 1, 8, 8], strides = [1, 1, 1, 1]} : vector<1x4x8x8xf32> to vector<1x1x8x8xf32>
    %260 = vector.shape_cast %259 : vector<1x1x8x8xf32> to vector<1x8x8xf32>
    %261 = vector.extract_strided_slice %246 {offsets = [0, 1, 0, 0], sizes = [1, 1, 8, 8], strides = [1, 1, 1, 1]} : vector<1x4x8x8xf32> to vector<1x1x8x8xf32>
    %262 = vector.shape_cast %261 : vector<1x1x8x8xf32> to vector<1x8x8xf32>
    %263 = vector.extract_strided_slice %246 {offsets = [0, 2, 0, 0], sizes = [1, 1, 8, 8], strides = [1, 1, 1, 1]} : vector<1x4x8x8xf32> to vector<1x1x8x8xf32>
    %264 = vector.shape_cast %263 : vector<1x1x8x8xf32> to vector<1x8x8xf32>
    %265 = vector.extract_strided_slice %246 {offsets = [0, 3, 0, 0], sizes = [1, 1, 8, 8], strides = [1, 1, 1, 1]} : vector<1x4x8x8xf32> to vector<1x1x8x8xf32>
    %266 = vector.shape_cast %265 : vector<1x1x8x8xf32> to vector<1x8x8xf32>
    %267 = tpu.concatenate %260, %262, %264, %266 in 2 : vector<1x8x8xf32>, vector<1x8x8xf32>, vector<1x8x8xf32>, vector<1x8x8xf32> -> vector<1x8x32xf32>
    %268 = arith.truncf %267 : vector<1x8x32xf32> to vector<1x8x32xbf16>
    %269 = vector.extract_strided_slice %248 {offsets = [0, 0, 0, 0], sizes = [1, 1, 8, 8], strides = [1, 1, 1, 1]} : vector<1x4x8x8xf32> to vector<1x1x8x8xf32>
    %270 = vector.shape_cast %269 : vector<1x1x8x8xf32> to vector<1x8x8xf32>
    %271 = vector.extract_strided_slice %248 {offsets = [0, 1, 0, 0], sizes = [1, 1, 8, 8], strides = [1, 1, 1, 1]} : vector<1x4x8x8xf32> to vector<1x1x8x8xf32>
    %272 = vector.shape_cast %271 : vector<1x1x8x8xf32> to vector<1x8x8xf32>
    %273 = vector.extract_strided_slice %248 {offsets = [0, 2, 0, 0], sizes = [1, 1, 8, 8], strides = [1, 1, 1, 1]} : vector<1x4x8x8xf32> to vector<1x1x8x8xf32>
    %274 = vector.shape_cast %273 : vector<1x1x8x8xf32> to vector<1x8x8xf32>
    %275 = vector.extract_strided_slice %248 {offsets = [0, 3, 0, 0], sizes = [1, 1, 8, 8], strides = [1, 1, 1, 1]} : vector<1x4x8x8xf32> to vector<1x1x8x8xf32>
    %276 = vector.shape_cast %275 : vector<1x1x8x8xf32> to vector<1x8x8xf32>
    %277 = tpu.concatenate %270, %272, %274, %276 in 2 : vector<1x8x8xf32>, vector<1x8x8xf32>, vector<1x8x8xf32>, vector<1x8x8xf32> -> vector<1x8x32xf32>
    %278 = arith.truncf %277 : vector<1x8x32xf32> to vector<1x8x32xbf16>
    "tpu.trace_start"() <{level = 10 : i32, message = "blk,bmk->blm"}> : () -> ()
    %cst_37 = arith.constant dense<0.000000e+00> : vector<1x8x8xf32>
    %279 = tpu.matmul %258, %268, %cst_37 {dimension_numbers = #tpu.dot_dimension_numbers<[2], [2], [1], [1], [0, 0, 0, 1, 1, 1], [0], [0]>} : vector<1x8x32xbf16>, vector<1x8x32xbf16>, vector<1x8x8xf32> -> vector<1x8x8xf32>
    "tpu.trace_stop"() : () -> ()
    %cst_38 = arith.constant dense<0xFF800000> : vector<1x8xf32>
    %280 = vector.multi_reduction <maximumf>, %279, %cst_38 [2] : vector<1x8x8xf32> to vector<1x8xf32>
    %281 = vector.shape_cast %280 : vector<1x8xf32> to vector<1x8x1xf32>
    %282 = vector.broadcast %281 : vector<1x8x1xf32> to vector<1x8x8xf32>
    %283 = arith.subf %279, %282 : vector<1x8x8xf32>
    %284 = math.exp %283 : vector<1x8x8xf32>
    %cst_39 = arith.constant dense<0.000000e+00> : vector<1x8xf32>
    %285 = vector.multi_reduction <add>, %284, %cst_39 [2] : vector<1x8x8xf32> to vector<1x8xf32>
    %286 = vector.shape_cast %285 : vector<1x8xf32> to vector<1x8x1xf32>
    %287 = tpu.reciprocal %286 {approx = true} : vector<1x8x1xf32> -> vector<1x8x1xf32>
    %288 = vector.broadcast %287 : vector<1x8x1xf32> to vector<1x8x8xf32>
    %289 = arith.mulf %284, %288 : vector<1x8x8xf32>
    %290 = arith.truncf %289 : vector<1x8x8xf32> to vector<1x8x8xbf16>
    "tpu.trace_start"() <{level = 10 : i32, message = "blm,bmk->blk"}> : () -> ()
    %cst_40 = arith.constant dense<0.000000e+00> : vector<1x8x32xf32>
    %291 = tpu.matmul %290, %278, %cst_40 {dimension_numbers = #tpu.dot_dimension_numbers<[2], [1], [1], [2], [0, 0, 0, 1, 1, 2], [0], [0]>} : vector<1x8x8xbf16>, vector<1x8x32xbf16>, vector<1x8x32xf32> -> vector<1x8x32xf32>
    "tpu.trace_stop"() : () -> ()
    %292 = vector.extract_strided_slice %291 {offsets = [0, 0, 0], sizes = [1, 8, 8], strides = [1, 1, 1]} : vector<1x8x32xf32> to vector<1x8x8xf32>
    %293 = vector.extract_strided_slice %291 {offsets = [0, 0, 8], sizes = [1, 8, 8], strides = [1, 1, 1]} : vector<1x8x32xf32> to vector<1x8x8xf32>
    %294 = vector.extract_strided_slice %291 {offsets = [0, 0, 16], sizes = [1, 8, 8], strides = [1, 1, 1]} : vector<1x8x32xf32> to vector<1x8x8xf32>
    %295 = vector.extract_strided_slice %291 {offsets = [0, 0, 24], sizes = [1, 8, 8], strides = [1, 1, 1]} : vector<1x8x32xf32> to vector<1x8x8xf32>
    %296 = vector.shape_cast %292 : vector<1x8x8xf32> to vector<1x1x8x8xf32>
    %297 = vector.shape_cast %293 : vector<1x8x8xf32> to vector<1x1x8x8xf32>
    %298 = vector.shape_cast %294 : vector<1x8x8xf32> to vector<1x1x8x8xf32>
    %299 = vector.shape_cast %295 : vector<1x8x8xf32> to vector<1x1x8x8xf32>
    %300 = tpu.concatenate %296, %297, %298, %299 in 1 : vector<1x1x8x8xf32>, vector<1x1x8x8xf32>, vector<1x1x8x8xf32>, vector<1x1x8x8xf32> -> vector<1x4x8x8xf32>
    %301 = vector.shape_cast %300 : vector<1x4x8x8xf32> to vector<32x8xf32>
    %302 = tpu.concatenate %124, %183, %242, %301 in 1 : vector<32x8xf32>, vector<32x8xf32>, vector<32x8xf32>, vector<32x8xf32> -> vector<32x32xf32>
    %303 = arith.truncf %302 : vector<32x32xf32> to vector<32x32xbf16>
    %cst_41 = arith.constant dense<0.000000e+00> : vector<32x32xf32>
    %304 = tpu.matmul %303, %2, %cst_41 {dimension_numbers = #tpu.dot_dimension_numbers<[1], [0], [0], [1], [0, 0, 1, 1], [], []>} : vector<32x32xbf16>, vector<32x32xbf16>, vector<32x32xf32> -> vector<32x32xf32>
    %305 = arith.addf %0, %304 : vector<32x32xf32>
    %306 = vector.broadcast %10 : vector<1x32xf32> to vector<32x32xf32>
    %307 = arith.addf %305, %306 : vector<32x32xf32>
    %cst_42 = arith.constant dense<0.000000e+00> : vector<32xf32>
    %308 = vector.multi_reduction <add>, %307, %cst_42 [1] : vector<32x32xf32> to vector<32xf32>
    %309 = vector.shape_cast %308 : vector<32xf32> to vector<32x1xf32>
    %cst_43 = arith.constant 3.200000e+01 : f32
    %310 = vector.broadcast %cst_43 : f32 to vector<32x1xf32>
    %311 = arith.divf %309, %310 : vector<32x1xf32>
    %312 = vector.broadcast %311 : vector<32x1xf32> to vector<32x32xf32>
    %313 = arith.subf %307, %312 : vector<32x32xf32>
    %314 = arith.mulf %313, %313 : vector<32x32xf32>
    %cst_44 = arith.constant dense<0.000000e+00> : vector<32xf32>
    %315 = vector.multi_reduction <add>, %314, %cst_44 [1] : vector<32x32xf32> to vector<32xf32>
    %316 = vector.shape_cast %315 : vector<32xf32> to vector<32x1xf32>
    %cst_45 = arith.constant 3.200000e+01 : f32
    %317 = vector.broadcast %cst_45 : f32 to vector<32x1xf32>
    %318 = arith.divf %316, %317 : vector<32x1xf32>
    %319 = vector.broadcast %311 : vector<32x1xf32> to vector<32x32xf32>
    %320 = arith.subf %307, %319 : vector<32x32xf32>
    %cst_46 = arith.constant 9.99999974E-6 : f32
    %321 = vector.broadcast %cst_46 : f32 to vector<32x1xf32>
    %322 = arith.addf %318, %321 : vector<32x1xf32>
    %323 = math.rsqrt %322 : vector<32x1xf32>
    %324 = vector.broadcast %323 : vector<32x1xf32> to vector<32x32xf32>
    %325 = arith.mulf %320, %324 : vector<32x32xf32>
    %326 = vector.broadcast %8 : vector<1x32xf32> to vector<32x32xf32>
    %327 = arith.mulf %325, %326 : vector<32x32xf32>
    %328 = vector.broadcast %9 : vector<1x32xf32> to vector<32x32xf32>
    %329 = arith.addf %327, %328 : vector<32x32xf32>
    %330 = arith.truncf %329 : vector<32x32xf32> to vector<32x32xbf16>
    %cst_47 = arith.constant dense<0.000000e+00> : vector<32x64xf32>
    %331 = tpu.matmul %330, %3, %cst_47 {dimension_numbers = #tpu.dot_dimension_numbers<[1], [0], [0], [1], [0, 0, 1, 1], [], []>} : vector<32x32xbf16>, vector<32x64xbf16>, vector<32x64xf32> -> vector<32x64xf32>
    %332 = vector.broadcast %12 : vector<1x64xf32> to vector<32x64xf32>
    %333 = arith.addf %331, %332 : vector<32x64xf32>
    %cst_48 = arith.constant 0.000000e+00 : f32
    %334 = vector.broadcast %cst_48 : f32 to vector<32x64xf32>
    %335 = arith.maximumf %333, %334 : vector<32x64xf32>
    %336 = arith.truncf %335 : vector<32x64xf32> to vector<32x64xbf16>
    %cst_49 = arith.constant dense<0.000000e+00> : vector<32x32xf32>
    %337 = tpu.matmul %336, %5, %cst_49 {dimension_numbers = #tpu.dot_dimension_numbers<[1], [0], [0], [1], [0, 0, 1, 1], [], []>} : vector<32x64xbf16>, vector<64x32xbf16>, vector<32x32xf32> -> vector<32x32xf32>
    %338 = vector.broadcast %11 : vector<1x32xf32> to vector<32x32xf32>
    %339 = arith.addf %337, %338 : vector<32x32xf32>
    %340 = arith.addf %307, %339 : vector<32x32xf32>
    %c0_50 = arith.constant 0 : index
    %c0_51 = arith.constant 0 : index
    %341 = vector.load %arg5[%c0_50, %c0_51] : memref<32x32xf32, #tpu.memory_space<vmem>>, vector<32x32xf32>
    tpu.vector_store %arg5[%c0_50, %c0_51], %340 {strides = array<i32>} : memref<32x32xf32, #tpu.memory_space<vmem>>, vector<32x32xf32>,
    return
  }
  func.func @transform_0(%arg0: i32) -> (i32, i32) {
    %c0_i32 = arith.constant 0 : i32
    %c0_i32_0 = arith.constant 0 : i32
    return %arg0, %c0_i32 : i32, i32
  }
  func.func @transform_1(%arg0: i32) -> (i32, i32) {
    %c0_i32 = arith.constant 0 : i32
    %c0_i32_0 = arith.constant 0 : i32
    %c0_i32_1 = arith.constant 0 : i32
    return %c0_i32, %c0_i32_0 : i32, i32
  }
  func.func @transform_2(%arg0: i32) -> (i32, i32) {
    %c0_i32 = arith.constant 0 : i32
    %c0_i32_0 = arith.constant 0 : i32
    %c0_i32_1 = arith.constant 0 : i32
    return %c0_i32, %c0_i32_0 : i32, i32
  }
  func.func @transform_3(%arg0: i32) -> (i32, i32) {
    %c0_i32 = arith.constant 0 : i32
    %c0_i32_0 = arith.constant 0 : i32
    %c0_i32_1 = arith.constant 0 : i32
    return %c0_i32, %c0_i32_0 : i32, i32
  }
  func.func @transform_4(%arg0: i32) -> (i32, i32) {
    %c0_i32 = arith.constant 0 : i32
    %c0_i32_0 = arith.constant 0 : i32
    return %arg0, %c0_i32 : i32, i32
  }
}

</mosaic_0001>

<llo_original>
// kernel: tpu_custom_call.1
$region0: #{tpu_custom_call.1}
  #allocation0 [shape = 'u32[]', space=smem, size = 0x4, offset = 0x4, fixed_abs, tag = 'smem constant byte address 0x4 - core index']
  #allocation1 [shape = 'u32[144,128]{1,0:T(1,128)}', space=vmem, size = 0x12000, scoped, tag = 'internal scratch']
  %s0 = inlined_call_operand.vmem [shape: f32[64,32], index: 0, kind: input, shape index: {}]
  %s1 = inlined_call_operand.vmem [shape: bf16[32,288], index: 1, kind: input, shape index: {}]
  %s2 = inlined_call_operand.vmem [shape: bf16[64,32], index: 2, kind: input, shape index: {}]
  %s3 = inlined_call_operand.vmem [shape: f32[8,256], index: 3, kind: input, shape index: {}]
  %s4 = inlined_call_operand.vmem [shape: f32[64,32], index: 4, kind: output, shape index: {}]
  %s5 = sld [smem:[#allocation0]]
  $region49: #{tpu_custom_call.1} parent=0
    _
  %s7 = ssub.s32 1, %s5
  %s8 = scalar_select 0, %s7, %s5
  loop: start=0, step=1, limit=4
  $region2: #{tpu_custom_call.1} parent=0 // loop_pre_header
    _
  $region3: #{tpu_custom_call.1} parent=0 // loop_header
    %s10 = sphi 0, %s14
    %p11 = scmp.ge.s32.totalorder %s10, 4
    %s20 = sphi 0, %s22
    %s23 = sphi 0, %s20
    %s24 = sphi 0, %s23
    %s40 = sphi 0, %s24
    %s44 = sphi 0, %s44
    %s46 = sphi 0, %s44
    %s47 = sphi 0, %s46
    %s61 = sphi 0, %s47
    %s65 = sphi 0, %s65
    %s67 = sphi 0, %s65
    %s68 = sphi 0, %s67
    %s82 = sphi 0, %s68
    %s86 = sphi 0, %s86
    %s88 = sphi 0, %s86
    %s89 = sphi 0, %s88
    %s103 = sphi 0, %s89
    %s109 = sphi 0, %s111
    %s112 = sphi 0, %s109
    %s113 = sphi 0, %s112
    %s129 = sphi 0, %s113
  $region4: #{tpu_custom_call.1} parent=0 // loop_header_branch
    %13 = sbr.rel (%p11) target = $region8
  $region5: #{tpu_custom_call.1} parent=0 // loop_body
    %s15 = ssub.s32 %s10, 1
    %s16 = ssub.s32 %s10, 2
    %s17 = sadd.s32 %s10, 1
    %s18 = ssub.s32 %s10, %s17
    %p19 = scmp.eq.s32.totalorder %s18, 0
    %s21 = sadd.s32 %s20, 1
    %s22 = scalar_select %p19, %s20, %s21
    %p25 = pneg %p19
    %p26 = scmp.eq.s32.totalorder %s10, 1
    %p27 = por %p25, %p26
    %p28 = scmp.ne.s32.totalorder %s20, %s23
    %p29 = scmp.eq.s32.totalorder %s10, 0
    %p30 = por %p28, %p29
    %p31 = scmp.ne.s32.totalorder %s20, %s23
    %p32 = scmp.eq.s32.totalorder %s15, 1
    %p33 = por %p31, %p32
    %p34 = scmp.ne.s32.totalorder %s23, %s24
    %p35 = scmp.eq.s32.totalorder %s15, 0
    %p36 = por %p34, %p35
    %p37 = scmp.ne.s32.totalorder %s23, %s24
    %p38 = scmp.eq.s32.totalorder %s16, 1
    %p39 = por %p37, %p38
    %p41 = scmp.ne.s32.totalorder %s24, %s40
    %p42 = scmp.eq.s32.totalorder %s16, 0
    %p43 = por %p41, %p42
    %s45 = sadd.s32 %s44, 1
    %p48 = scmp.eq.s32.totalorder %s10, 1
    %p49 = scmp.ne.s32.totalorder %s44, %s46
    %p50 = scmp.eq.s32.totalorder %s10, 0
    %p51 = por %p49, %p50
    %p52 = scmp.ne.s32.totalorder %s44, %s46
    %p53 = scmp.eq.s32.totalorder %s15, 1
    %p54 = por %p52, %p53
    %p55 = scmp.ne.s32.totalorder %s46, %s47
    %p56 = scmp.eq.s32.totalorder %s15, 0
    %p57 = por %p55, %p56
    %p58 = scmp.ne.s32.totalorder %s46, %s47
    %p59 = scmp.eq.s32.totalorder %s16, 1
    %p60 = por %p58, %p59
    %p62 = scmp.ne.s32.totalorder %s47, %s61
    %p63 = scmp.eq.s32.totalorder %s16, 0
    %p64 = por %p62, %p63
    %s66 = sadd.s32 %s65, 1
    %p69 = scmp.eq.s32.totalorder %s10, 1
    %p70 = scmp.ne.s32.totalorder %s65, %s67
    %p71 = scmp.eq.s32.totalorder %s10, 0
    %p72 = por %p70, %p71
    %p73 = scmp.ne.s32.totalorder %s65, %s67
    %p74 = scmp.eq.s32.totalorder %s15, 1
    %p75 = por %p73, %p74
    %p76 = scmp.ne.s32.totalorder %s67, %s68
    %p77 = scmp.eq.s32.totalorder %s15, 0
    %p78 = por %p76, %p77
    %p79 = scmp.ne.s32.totalorder %s67, %s68
    %p80 = scmp.eq.s32.totalorder %s16, 1
    %p81 = por %p79, %p80
    %p83 = scmp.ne.s32.totalorder %s68, %s82
    %p84 = scmp.eq.s32.totalorder %s16, 0
    %p85 = por %p83, %p84
    %s87 = sadd.s32 %s86, 1
    %p90 = scmp.eq.s32.totalorder %s10, 1
    %p91 = scmp.ne.s32.totalorder %s86, %s88
    %p92 = scmp.eq.s32.totalorder %s10, 0
    %p93 = por %p91, %p92
    %p94 = scmp.ne.s32.totalorder %s86, %s88
    %p95 = scmp.eq.s32.totalorder %s15, 1
    %p96 = por %p94, %p95
    %p97 = scmp.ne.s32.totalorder %s88, %s89
    %p98 = scmp.eq.s32.totalorder %s15, 0
    %p99 = por %p97, %p98
    %p100 = scmp.ne.s32.totalorder %s88, %s89
    %p101 = scmp.eq.s32.totalorder %s16, 1
    %p102 = por %p100, %p101
    %p104 = scmp.ne.s32.totalorder %s89, %s103
    %p105 = scmp.eq.s32.totalorder %s16, 0
    %p106 = por %p104, %p105
    %s107 = ssub.s32 %s10, %s17
    %p108 = scmp.eq.s32.totalorder %s107, 0
    %s110 = sadd.s32 %s109, 1
    %s111 = scalar_select %p108, %s109, %s110
    %p114 = pneg %p108
    %p115 = scmp.eq.s32.totalorder %s10, 1
    %p116 = por %p114, %p115
    %p117 = scmp.ne.s32.totalorder %s109, %s112
    %p118 = scmp.eq.s32.totalorder %s10, 0
    %p119 = por %p117, %p118
    %p120 = scmp.ne.s32.totalorder %s109, %s112
    %p121 = scmp.eq.s32.totalorder %s15, 1
    %p122 = por %p120, %p121
    %p123 = scmp.ne.s32.totalorder %s112, %s113
    %p124 = scmp.eq.s32.totalorder %s15, 0
    %p125 = por %p123, %p124
    %p126 = scmp.ne.s32.totalorder %s112, %s113
    %p127 = scmp.eq.s32.totalorder %s16, 1
    %p128 = por %p126, %p127
    %p130 = scmp.ne.s32.totalorder %s113, %s129
    %p131 = scmp.eq.s32.totalorder %s16, 0
    %p132 = por %p130, %p131
    %p133 = scmp.le.s32.totalorder 1, %s10
    %p134 = scmp.lt.s32.totalorder %s10, 3
    %p135 = pnand %p133, %p134
    %p136 = pneg %p135
    // Predicated region
    $region9: #{tpu_custom_call.1} parent=5 // pred_check
      _
    $region10: #{tpu_custom_call.1} parent=5 // pred_check_branch
      %138 = sbr.rel (%p135) target = $region12
    $region11: #{tpu_custom_call.1} parent=5 // pred_region
      %s139 = ssub.s32 %s10, 1
      // Predicated region
      $region13: #{tpu_custom_call.1} parent=11 // pred_check
        %p140 = pneg %p57
      $region14: #{tpu_custom_call.1} parent=11 // pred_check_branch
        %142 = sbr.rel (%p140) target = $region16
      $region15: #{tpu_custom_call.1} parent=11 // pred_region
        _
      $region16: #{tpu_custom_call.1} parent=11 // pred_fallthru
        _
      // Predicated region
      $region17: #{tpu_custom_call.1} parent=11 // pred_check
        %p143 = pneg %p78
      $region18: #{tpu_custom_call.1} parent=11 // pred_check_branch
        %145 = sbr.rel (%p143) target = $region20
      $region19: #{tpu_custom_call.1} parent=11 // pred_region
        _
      $region20: #{tpu_custom_call.1} parent=11 // pred_fallthru
        _
      // Predicated region
      $region21: #{tpu_custom_call.1} parent=11 // pred_check
        %p146 = pneg %p99
      $region22: #{tpu_custom_call.1} parent=11 // pred_check_branch
        %148 = sbr.rel (%p146) target = $region24
      $region23: #{tpu_custom_call.1} parent=11 // pred_region
        _
      $region24: #{tpu_custom_call.1} parent=11 // pred_fallthru
        _
    $region12: #{tpu_custom_call.1} parent=5 // pred_fallthru
      _
    %p149 = scmp.lt.s32.totalorder %s10, 2
    // Predicated region
    $region25: #{tpu_custom_call.1} parent=5 // pred_check
      %p150 = pneg %p149
    $region26: #{tpu_custom_call.1} parent=5 // pred_check_branch
      %152 = sbr.rel (%p150) target = $region28
    $region27: #{tpu_custom_call.1} parent=5 // pred_region
      // Predicated region
      $region29: #{tpu_custom_call.1} parent=27 // pred_check
        %p153 = pneg %p30
      $region30: #{tpu_custom_call.1} parent=27 // pred_check_branch
        %155 = sbr.rel (%p153) target = $region32
      $region31: #{tpu_custom_call.1} parent=27 // pred_region
        %s156 = smul.u32 4, %s10
        %p157 = scmp.lt.s32.totalorder %s156, 7
        %s158 = scalar_select %p157, %s156, 7
        %s159 = smul.addr %s158, 8
        %s160 = scalar_lea.vmem %s0, %s159
        %s161 = smul.u32 4, %s10
      $region32: #{tpu_custom_call.1} parent=27 // pred_fallthru
        _
    $region28: #{tpu_custom_call.1} parent=5 // pred_fallthru
      _
    %p162 = scmp.le.s32.totalorder 1, %s10
    %p163 = scmp.lt.s32.totalorder %s10, 3
    %p164 = pnand %p162, %p163
    %p165 = pneg %p164
    // Predicated region
    $region33: #{tpu_custom_call.1} parent=5 // pred_check
      _
    $region34: #{tpu_custom_call.1} parent=5 // pred_check_branch
      %167 = sbr.rel (%p164) target = $region36
    $region35: #{tpu_custom_call.1} parent=5 // pred_region
      %s168 = ssub.s32 %s10, 1
      %s169 = smul.u32 4, %s15
      %p170 = scmp.lt.s32.totalorder %s169, 7
      %s171 = scalar_select %p170, %s169, 7
      %s172 = smul.addr %s171, 8
      %s173 = scalar_lea.vmem %s0, %s172
      %p174 = pneg %p36
      %p175 = pneg %p33
      %p176 = pneg %p57
      %p177 = pneg %p54
      %p178 = pneg %p78
      %p179 = pneg %p75
      %p180 = pneg %p99
      %p181 = pneg %p96
      %p182 = pneg %p125
      %p183 = pneg %p122
      %s184 = smul.u32 4, %s15
      %p185 = scmp.lt.s32.totalorder %s184, 7
      %s186 = scalar_select %p185, %s184, 7
      %s187 = smul.addr %s186, 8
      %s188 = scalar_lea.vmem %s4, %s187
      %s189 = smul.u32 4, %s15
      %p190 = scmp.lt.s32.totalorder %s189, 7
      %s191 = scalar_select %p190, %s189, 7
      %s192 = smul.addr %s191, 8
      %s193 = scalar_lea.vmem %s0, %s192
      %s194 = smul.u32 4, %s15
      %s195 = smul.u32 4, %s15
      %p196 = scmp.lt.s32.totalorder %s195, 7
      %s197 = scalar_select %p196, %s195, 7
      %s198 = smul.addr %s197, 8
      %s199 = scalar_lea.vmem %s4, %s198
      %s200 = smul.u32 4, %s15
      %v202 = vld [vmem:[%s193] sm:$0xff]
      %v203 = vld [vmem:[%s193 + $0x8] sm:$0xff]
      %v204 = vld [vmem:[%s193 + $0x10] sm:$0xff]
      %v205 = vld [vmem:[%s193 + $0x18] sm:$0xff]
      %v206 = vld [vmem:[%s1] sm:$0xff]
      %v207 = vld [vmem:[%s1 + $0xc] sm:$0xff]
      %v208 = vld [vmem:[%s1 + $0x18] sm:$0xff]
      %v209 = vld [vmem:[%s1 + $0x24] sm:$0xff]
      %v210 = vld [vmem:[%s1 + $0x4] sm:$0xf]
      %v211 = vld [vmem:[%s1 + $0x10] sm:$0xf]
      %v212 = vld [vmem:[%s1 + $0x1c] sm:$0xf]
      %v213 = vld [vmem:[%s1 + $0x28] sm:$0xf]
      %v214 = vld [vmem:[%s1 + $0x8] sm:$0xf]
      %v215 = vld [vmem:[%s1 + $0x14] sm:$0xf]
      %v216 = vld [vmem:[%s1 + $0x20] sm:$0xf]
      %v217 = vld [vmem:[%s1 + $0x2c] sm:$0xf]
      %v218 = vld [vmem:[%s2] sm:$0xf]
      %v219 = vld [vmem:[%s2 + $0x4] sm:$0xf]
      %v220 = vld [vmem:[%s2 + $0x8] sm:$0xf]
      %v221 = vld [vmem:[%s2 + $0xc] sm:$0xf]
      %v222 = vld [vmem:[%s2 + $0x10] sm:$0xf]
      %v223 = vld [vmem:[%s2 + $0x14] sm:$0xf]
      %v224 = vld [vmem:[%s2 + $0x18] sm:$0xf]
      %v225 = vld [vmem:[%s2 + $0x1c] sm:$0xf]
      %v226 = vld [vmem:[%s3] ss:$0 sm:$0xff]
      %v227 = vld [vmem:[%s3 + $0x1] ss:$0 sm:$0xff]
      %v228 = vld [vmem:[%s3 + $0x2] ss:$0 sm:$0xff]
      %v229 = vld [vmem:[%s3 + $0x3] ss:$0 sm:$0xff]
      %v230 = vld [vmem:[%s3 + $0x4] ss:$0 sm:$0xff]
      %v231 = vld [vmem:[%s3 + $0x5] ss:$0 sm:$0xff]
      %v232 = vld [vmem:[%s3 + $0x6] ss:$0 sm:$0xff]
      %s233 = scalar_lea.vmem %s3, 7
      %v234 = vld [vmem:[%s233] ss:$8 sm:$0x3]
      %vm235 = vcmask 261120
      %v236 = vsel %vm235, %v202, 0.0
      %237 = vadd.xlane.f32.xlu0 %v236
      %v238 = vpop.xlane.xlu0 %237
      %v239 = vsel %vm235, %v203, 0.0
      %240 = vadd.xlane.f32.xlu0 %v239
      %v241 = vpop.xlane.xlu0 %240
      %v242 = vsel %vm235, %v204, 0.0
      %243 = vadd.xlane.f32.xlu0 %v242
      %v244 = vpop.xlane.xlu0 %243
      %v245 = vsel %vm235, %v205, 0.0
      %246 = vadd.xlane.f32.xlu0 %v245
      %v247 = vpop.xlane.xlu0 %246
      %v248 = vrcp.pop 32.0
      %v249 = vmul.f32 %v238, %v248
      %v250 = vmul.f32 %v241, %v248
      %v251 = vmul.f32 %v244, %v248
      %v252 = vmul.f32 %v247, %v248
      %v253 = vsub.f32 %v202, %v249
      %v254 = vsub.f32 %v203, %v250
      %v255 = vsub.f32 %v204, %v251
      %v256 = vsub.f32 %v205, %v252
      %v257 = vmul.f32 %v253, %v253
      %v258 = vmul.f32 %v254, %v254
      %v259 = vmul.f32 %v255, %v255
      %v260 = vmul.f32 %v256, %v256
      %v261 = vsel %vm235, %v257, 0.0
      %262 = vadd.xlane.f32.xlu0 %v261
      %v263 = vpop.xlane.xlu0 %262
      %v264 = vsel %vm235, %v258, 0.0
      %265 = vadd.xlane.f32.xlu0 %v264
      %v266 = vpop.xlane.xlu0 %265
      %v267 = vsel %vm235, %v259, 0.0
      %268 = vadd.xlane.f32.xlu0 %v267
      %v269 = vpop.xlane.xlu0 %268
      %v270 = vsel %vm235, %v260, 0.0
      %271 = vadd.xlane.f32.xlu0 %v270
      %v272 = vpop.xlane.xlu0 %271
      %v273 = vmul.f32 %v263, %v248
      %v274 = vmul.f32 %v266, %v248
      %v275 = vmul.f32 %v269, %v248
      %v276 = vmul.f32 %v272, %v248
      %v277 = vadd.f32 %v273, 1e-05
      %v278 = vadd.f32 %v274, 1e-05
      %v279 = vadd.f32 %v275, 1e-05
      %v280 = vadd.f32 %v276, 1e-05
      %v281 = vrsqrt.pop %v277
      %v282 = vrsqrt.pop %v278
      %v283 = vrsqrt.pop %v279
      %v284 = vrsqrt.pop %v280
      %v285 = vmul.f32 %v253, %v281
      %v286 = vmul.f32 %v254, %v282
      %v287 = vmul.f32 %v255, %v283
      %v288 = vmul.f32 %v256, %v284
      %v289 = vmul.f32 %v285, %v226
      %v290 = vmul.f32 %v286, %v226
      %v291 = vmul.f32 %v287, %v226
      %v292 = vmul.f32 %v288, %v226
      %v293 = vadd.f32 %v289, %v227
      %v294 = vadd.f32 %v290, %v227
      %v295 = vadd.f32 %v291, %v227
      %v296 = vadd.f32 %v292, %v227
      %v297 = vpack.c.bf16 %v294, %v293
      %v298 = vpack.c.bf16 %v296, %v295
      %v300 = vlaneseq
      %v301 = vshrl.u32 %v300, 7
      %v302 = vsub.s32 0, %v301
      %v303 = vrot.slane %v234, %v302
      %v304 = vlaneseq
      %v305 = vshrl.u32 %v304, 7
      %v306 = vsub.s32 1, %v305
      %v307 = vrot.slane %v234, %v306
      %v314 = vunpack.c.l.b16 %v206
      %v315 = vunpack.c.h.b16 %v206
      %v316 = vunpack.c.l.b16 %v207
      %v317 = vunpack.c.h.b16 %v207
      %v318 = vunpack.c.l.b16 %v208
      %v319 = vunpack.c.h.b16 %v208
      %v320 = vunpack.c.l.b16 %v209
      %v321 = vunpack.c.h.b16 %v209
      %v322 = vpack.c.b16 %v316, %v314
      %v323 = vpack.c.b16 %v317, %v315
      %v324 = vpack.c.b16 %v320, %v318
      %v325 = vpack.c.b16 %v321, %v319
      %v331 = vsel %vm235, %v297, 0
      %v334 = vsel %vm235, %v298, 0
      %336 = vmatprep.subr.bf16.mxu0 %v323
      %337 = vmatpush1.bf16.msra.mxu0 %v322
      %338 = vmatprep.subr.bf16.mxu0 %v325
      %339 = vmatpush1.bf16.msra.mxu0 %v324
      %340 = vmatprep.subr.bf16.mxu0 0
      %341 = vmatpush1.bf16.msra.mxu0 0
      %342 = vmatprep.subr.bf16.mxu0 0
      %343 = vmatpush1.bf16.msra.mxu0 0
      %344 = vmatprep.subr.bf16.mxu0 0
      %345 = vmatpush1.bf16.msra.mxu0 0
      %346 = vmatprep.subr.bf16.mxu0 0
      %347 = vmatpush1.bf16.msra.mxu0 0
      %348 = vmatprep.subr.bf16.mxu0 0
      %349 = vmatpush1.bf16.msra.mxu0 0
      %350 = vmatprep.subr.bf16.mxu0 0
      %351 = vmatpush1.bf16.msra.mxu0 0
      %352 = vmatprep.subr.bf16.mxu0 0
      %353 = vmatpush1.bf16.msra.mxu0 0
      %354 = vmatprep.subr.bf16.mxu0 0
      %355 = vmatpush1.bf16.msra.mxu0 0
      %356 = vmatprep.subr.bf16.mxu0 0
      %357 = vmatpush1.bf16.msra.mxu0 0
      %358 = vmatprep.subr.bf16.mxu0 0
      %359 = vmatpush1.bf16.msra.mxu0 0
      %360 = vmatprep.subr.bf16.mxu0 0
      %361 = vmatpush1.bf16.msra.mxu0 0
      %362 = vmatprep.subr.bf16.mxu0 0
      %363 = vmatpush1.bf16.msra.mxu0 0
      %364 = vmatprep.subr.bf16.mxu0 0
      %365 = vmatpush1.bf16.msra.mxu0 0
      %366 = vmatprep.subr.bf16.mxu0 0
      %367 = vmatpush1.bf16.msra.mxu0 0
      %368 = vmatprep.mubr.bf16.mxu0 0
      %369 = vmatmul.mubr.bf16.gmra.mrb[0].mxu0 %v331
      %v370 = vpop.f32.mrb[0].mxu0
      %v371 = vadd.f32 %v303, %v370
      %v372 = vpop.f32.mrb[0].mxu0
      %v373 = vadd.f32 %v307, %v372
      %v374 = vpop.f32.mrb[0].mxu0
      %v375 = vadd.f32 %v303, %v374
      %v376 = vpop.f32.mrb[0].mxu0
      %v377 = vadd.f32 %v307, %v376
      %378 = vmatprep.mubr.bf16.mxu0 0
      %379 = vmatmul.mubr.bf16.gmra.mrb[0].mxu0 %v334
      %v380 = vpop.f32.mrb[0].mxu0
      %v381 = vadd.f32 %v303, %v380
      %v382 = vpop.f32.mrb[0].mxu0
      %v383 = vadd.f32 %v307, %v382
      %v384 = vpop.f32.mrb[0].mxu0
      %v385 = vadd.f32 %v303, %v384
      %v386 = vpop.f32.mrb[0].mxu0
      %v387 = vadd.f32 %v307, %v386
      %388 = vdwg.mxu0
      %393 = vrot.lane.b32.xlu0 %v373, 96
      %v394 = vpop.permute.xlu0 %393
      %395 = vrot.lane.b32.xlu0 %v377, 96
      %v396 = vpop.permute.xlu0 %395
      %397 = vrot.lane.b32.xlu0 %v383, 96
      %v398 = vpop.permute.xlu0 %397
      %399 = vrot.lane.b32.xlu0 %v387, 96
      %v400 = vpop.permute.xlu0 %399
      %v405 = vmul.f32 %v371, %v394
      %v406 = vmul.f32 %v371, %v396
      %v407 = vmul.f32 %v371, %v398
      %v408 = vmul.f32 %v371, %v400
      %v409 = vpack.c.bf16 %v406, %v405
      %v410 = vpack.c.bf16 %v408, %v407
      %413 = vrot.lane.b32.xlu0 %v409, 32
      %v414 = vpop.permute.xlu0 %413
      %415 = vrot.lane.b32.xlu0 %v410, 32
      %v416 = vpop.permute.xlu0 %415
      %v421 = vunpack.c.l.b16 %v214
      %v422 = vunpack.c.l.b16 %v215
      %v423 = vunpack.c.l.b16 %v216
      %v424 = vunpack.c.l.b16 %v217
      %v425 = vpack.c.b16 %v422, %v421
      %v426 = vpack.c.b16 %v424, %v423
      %v430 = vsel %vm235, %v414, 0
      %v433 = vsel %vm235, %v416, 0
      %435 = vmatprep.subr.bf16.mxu0 0
      %436 = vmatpush1.bf16.msra.mxu0 %v425
      %437 = vmatprep.subr.bf16.mxu0 0
      %438 = vmatpush1.bf16.msra.mxu0 %v426
      %439 = vmatprep.subr.bf16.mxu0 0
      %440 = vmatpush1.bf16.msra.mxu0 0
      %441 = vmatprep.subr.bf16.mxu0 0
      %442 = vmatpush1.bf16.msra.mxu0 0
      %443 = vmatprep.subr.bf16.mxu0 0
      %444 = vmatpush1.bf16.msra.mxu0 0
      %445 = vmatprep.subr.bf16.mxu0 0
      %446 = vmatpush1.bf16.msra.mxu0 0
      %447 = vmatprep.subr.bf16.mxu0 0
      %448 = vmatpush1.bf16.msra.mxu0 0
      %449 = vmatprep.subr.bf16.mxu0 0
      %450 = vmatpush1.bf16.msra.mxu0 0
      %451 = vmatprep.subr.bf16.mxu0 0
      %452 = vmatpush1.bf16.msra.mxu0 0
      %453 = vmatprep.subr.bf16.mxu0 0
      %454 = vmatpush1.bf16.msra.mxu0 0
      %455 = vmatprep.subr.bf16.mxu0 0
      %456 = vmatpush1.bf16.msra.mxu0 0
      %457 = vmatprep.subr.bf16.mxu0 0
      %458 = vmatpush1.bf16.msra.mxu0 0
      %459 = vmatprep.subr.bf16.mxu0 0
      %460 = vmatpush1.bf16.msra.mxu0 0
      %461 = vmatprep.subr.bf16.mxu0 0
      %462 = vmatpush1.bf16.msra.mxu0 0
      %463 = vmatprep.subr.bf16.mxu0 0
      %464 = vmatpush1.bf16.msra.mxu0 0
      %465 = vmatprep.subr.bf16.mxu0 0
      %466 = vmatpush1.bf16.msra.mxu0 0
      %467 = vmatprep.mubr.bf16.mxu0 0
      %468 = vmatmul.mubr.bf16.gmra.mrb[0].mxu0 %v430
      %v469 = vpop.f32.mrb[0].mxu0
      %v470 = vadd.f32 0.0, %v469
      %v471 = vpop.f32.mrb[0].mxu0
      %v472 = vpop.f32.mrb[0].mxu0
      %v473 = vadd.f32 0.0, %v472
      %v474 = vpop.f32.mrb[0].mxu0
      %475 = vmatprep.mubr.bf16.mxu0 0
      %476 = vmatmul.mubr.bf16.gmra.mrb[0].mxu0 %v433
      %v477 = vpop.f32.mrb[0].mxu0
      %v478 = vadd.f32 0.0, %v477
      %v479 = vpop.f32.mrb[0].mxu0
      %v480 = vpop.f32.mrb[0].mxu0
      %v481 = vadd.f32 0.0, %v480
      %v482 = vpop.f32.mrb[0].mxu0
      %483 = vdwg.mxu0
      %v484 = vsel %vm235, %v470, -inf
      %v485 = vsel %vm235, %v473, -inf
      %v486 = vsel %vm235, %v478, -inf
      %v487 = vsel %vm235, %v481, -inf
      %v488 = vmax.f32 %v484, %v485
      %v489 = vmax.f32 %v486, %v487
      %v490 = vmax.f32 %v488, %v489
      %v491 = vsub.f32 %v470, %v490
      %v492 = vsub.f32 %v473, %v490
      %v493 = vsub.f32 %v478, %v490
      %v494 = vsub.f32 %v481, %v490
      %v495 = vmul.f32 %v491, 1.442695
      %v496 = vpow.pop %v495
      %v497 = vmul.f32 %v492, 1.442695
      %v498 = vpow.pop %v497
      %v499 = vmul.f32 %v493, 1.442695
      %v500 = vpow.pop %v499
      %v501 = vmul.f32 %v494, 1.442695
      %v502 = vpow.pop %v501
      %v503 = vsel %vm235, %v496, 0.0
      %v504 = vsel %vm235, %v498, 0.0
      %v505 = vadd.f32 %v503, %v504
      %v506 = vsel %vm235, %v500, 0.0
      %v507 = vadd.f32 %v505, %v506
      %v508 = vsel %vm235, %v502, 0.0
      %v509 = vadd.f32 %v507, %v508
      %v510 = vrcp.pop %v509
      %v511 = vmul.f32 %v496, %v510
      %v512 = vmul.f32 %v498, %v510
      %v513 = vmul.f32 %v500, %v510
      %v514 = vmul.f32 %v502, %v510
      %v515 = vmul.f32 %v371, %v511
      %v516 = vmul.f32 %v375, %v512
      %v517 = vmul.f32 %v381, %v513
      %v518 = vmul.f32 %v385, %v514
      %520 = vrot.lane.b32.xlu0 %v516, 8
      %v521 = vpop.permute.xlu0 %520
      %524 = vrot.lane.b32.xlu0 %v517, 16
      %v525 = vpop.permute.xlu0 %524
      %528 = vrot.lane.b32.xlu0 %v518, 24
      %v529 = vpop.permute.xlu0 %528
      %vm531 = vcmask 64512
      %v532 = vsel %vm531, %v515, %v521
      %vm533 = vcmask 130048
      %v534 = vsel %vm533, %v532, %v525
      %vm535 = vcmask 195584
      %v536 = vsel %vm535, %v534, %v529
      %v537 = vpack.c.bf16 %v536, %v536
      %539 = vrot.lane.b32.xlu0 %v371, 96
      %v540 = vpop.permute.xlu0 %539
      %543 = vrot.lane.b32.xlu0 %v375, 104
      %v544 = vpop.permute.xlu0 %543
      %547 = vrot.lane.b32.xlu0 %v381, 112
      %v548 = vpop.permute.xlu0 %547
      %551 = vrot.lane.b32.xlu0 %v385, 120
      %v552 = vpop.permute.xlu0 %551
      %v554 = vsel %vm531, %v540, %v544
      %v555 = vsel %vm533, %v554, %v548
      %v556 = vsel %vm535, %v555, %v552
      %v557 = vpack.c.bf16 %v556, %v556
      %558 = vrot.lane.b32.xlu0 %v371, 64
      %v559 = vpop.permute.xlu0 %558
      %561 = vrot.lane.b32.xlu0 %v375, 72
      %v562 = vpop.permute.xlu0 %561
      %564 = vrot.lane.b32.xlu0 %v381, 80
      %v565 = vpop.permute.xlu0 %564
      %567 = vrot.lane.b32.xlu0 %v385, 88
      %v568 = vpop.permute.xlu0 %567
      %v570 = vsel %vm531, %v559, %v562
      %v571 = vsel %vm533, %v570, %v565
      %v572 = vsel %vm535, %v571, %v568
      %v573 = vpack.c.bf16 %v572, %v572
      %v575 = vsel %vm235, %v537, 0
      %v578 = vsel %vm235, %v557, 0
      %580 = vmatprep.subr.bf16.mxu0 0
      %581 = vmatpush1.bf16.xpose.msra.mxu0 %v578
      %582 = vmatprep.subr.bf16.mxu0 0
      %583 = vmatpush1.bf16.xpose.msra.mxu0 0
      %584 = vmatprep.subr.bf16.mxu0 0
      %585 = vmatpush1.bf16.xpose.msra.mxu0 0
      %586 = vmatprep.subr.bf16.mxu0 0
      %587 = vmatpush1.bf16.xpose.msra.mxu0 0
      %588 = vmatprep.subr.bf16.mxu0 0
      %589 = vmatpush1.bf16.xpose.msra.mxu0 0
      %590 = vmatprep.subr.bf16.mxu0 0
      %591 = vmatpush1.bf16.xpose.msra.mxu0 0
      %592 = vmatprep.subr.bf16.mxu0 0
      %593 = vmatpush1.bf16.xpose.msra.mxu0 0
      %594 = vmatprep.subr.bf16.mxu0 0
      %595 = vmatpush1.bf16.xpose.msra.mxu0 0
      %596 = vmatprep.subr.bf16.mxu0 0
      %597 = vmatpush1.bf16.xpose.msra.mxu0 0
      %598 = vmatprep.subr.bf16.mxu0 0
      %599 = vmatpush1.bf16.xpose.msra.mxu0 0
      %600 = vmatprep.subr.bf16.mxu0 0
      %601 = vmatpush1.bf16.xpose.msra.mxu0 0
      %602 = vmatprep.subr.bf16.mxu0 0
      %603 = vmatpush1.bf16.xpose.msra.mxu0 0
      %604 = vmatprep.subr.bf16.mxu0 0
      %605 = vmatpush1.bf16.xpose.msra.mxu0 0
      %606 = vmatprep.subr.bf16.mxu0 0
      %607 = vmatpush1.bf16.xpose.msra.mxu0 0
      %608 = vmatprep.subr.bf16.mxu0 0
      %609 = vmatpush1.bf16.xpose.msra.mxu0 0
      %610 = vmatprep.subr.bf16.mxu0 0
      %611 = vmatpush1.bf16.xpose.msra.mxu0 0
      %612 = vmatprep.mubr.bf16.mxu0 0
      %613 = vmatmul.mubr.bf16.gmra.mrb[0].mxu0 %v575
      %v614 = vpop.f32.mrb[0].mxu0
      %v615 = vadd.f32 0.0, %v614
      %v616 = vpop.f32.mrb[0].mxu0
      %v617 = vpop.f32.mrb[0].mxu0
      %v618 = vpop.f32.mrb[0].mxu0
      %619 = vdwg.mxu0
      %v620 = vsel %vm531, %v615, -inf
      %621 = vmax.xlane.f32.xlu0 %v620
      %v622 = vpop.xlane.xlu0 %621
      %v623 = vsub.f32 %v615, %v622
      %v624 = vmul.f32 %v623, 1.442695
      %v625 = vpow.pop %v624
      %v626 = vsel %vm531, %v625, 0.0
      %627 = vadd.xlane.f32.xlu0 %v626
      %v628 = vpop.xlane.xlu0 %627
      %v629 = vrcp.pop %v628
      %v630 = vmul.f32 %v625, %v629
      %v631 = vpack.c.bf16 %v630, %v630
      %v633 = vsel %vm531, %v631, 0
      %vm635 = vcmask 1043456
      %v637 = vsel %vm635, %v573, 0
      %639 = vmatprep.subr.bf16.mxu0 0
      %640 = vmatpush1.bf16.msra.mxu0 %v637
      %641 = vmatprep.subr.bf16.mxu0 0
      %642 = vmatpush1.bf16.msra.mxu0 0
      %643 = vmatprep.subr.bf16.mxu0 0
      %644 = vmatpush1.bf16.msra.mxu0 0
      %645 = vmatprep.subr.bf16.mxu0 0
      %646 = vmatpush1.bf16.msra.mxu0 0
      %647 = vmatprep.subr.bf16.mxu0 0
      %648 = vmatpush1.bf16.msra.mxu0 0
      %649 = vmatprep.subr.bf16.mxu0 0
      %650 = vmatpush1.bf16.msra.mxu0 0
      %651 = vmatprep.subr.bf16.mxu0 0
      %652 = vmatpush1.bf16.msra.mxu0 0
      %653 = vmatprep.subr.bf16.mxu0 0
      %654 = vmatpush1.bf16.msra.mxu0 0
      %655 = vmatprep.subr.bf16.mxu0 0
      %656 = vmatpush1.bf16.msra.mxu0 0
      %657 = vmatprep.subr.bf16.mxu0 0
      %658 = vmatpush1.bf16.msra.mxu0 0
      %659 = vmatprep.subr.bf16.mxu0 0
      %660 = vmatpush1.bf16.msra.mxu0 0
      %661 = vmatprep.subr.bf16.mxu0 0
      %662 = vmatpush1.bf16.msra.mxu0 0
      %663 = vmatprep.subr.bf16.mxu0 0
      %664 = vmatpush1.bf16.msra.mxu0 0
      %665 = vmatprep.subr.bf16.mxu0 0
      %666 = vmatpush1.bf16.msra.mxu0 0
      %667 = vmatprep.subr.bf16.mxu0 0
      %668 = vmatpush1.bf16.msra.mxu0 0
      %669 = vmatprep.subr.bf16.mxu0 0
      %670 = vmatpush1.bf16.msra.mxu0 0
      %671 = vmatprep.mubr.bf16.mxu0 0
      %672 = vmatmul.mubr.bf16.gmra.mrb[0].mxu0 %v633
      %v673 = vpop.f32.mrb[0].mxu0
      %v674 = vadd.f32 0.0, %v673
      %v675 = vpop.f32.mrb[0].mxu0
      %v676 = vpop.f32.mrb[0].mxu0
      %v677 = vpop.f32.mrb[0].mxu0
      %678 = vdwg.mxu0
      %680 = vrot.lane.b32.xlu0 %v674, 120
      %v681 = vpop.permute.xlu0 %680
      %683 = vrot.lane.b32.xlu0 %v674, 112
      %v684 = vpop.permute.xlu0 %683
      %686 = vrot.lane.b32.xlu0 %v674, 104
      %v687 = vpop.permute.xlu0 %686
      %690 = vrot.lane.b32.xlu0 %v515, 120
      %v691 = vpop.permute.xlu0 %690
      %693 = vrot.lane.b32.xlu0 %v517, 8
      %v694 = vpop.permute.xlu0 %693
      %696 = vrot.lane.b32.xlu0 %v518, 16
      %v697 = vpop.permute.xlu0 %696
      %v699 = vsel %vm531, %v691, %v516
      %v700 = vsel %vm533, %v699, %v694
      %v701 = vsel %vm535, %v700, %v697
      %v702 = vpack.c.bf16 %v701, %v701
      %703 = vrot.lane.b32.xlu0 %v371, 88
      %v704 = vpop.permute.xlu0 %703
      %706 = vrot.lane.b32.xlu0 %v375, 96
      %v707 = vpop.permute.xlu0 %706
      %709 = vrot.lane.b32.xlu0 %v381, 104
      %v710 = vpop.permute.xlu0 %709
      %712 = vrot.lane.b32.xlu0 %v385, 112
      %v713 = vpop.permute.xlu0 %712
      %v715 = vsel %vm531, %v704, %v707
      %v716 = vsel %vm533, %v715, %v710
      %v717 = vsel %vm535, %v716, %v713
      %v718 = vpack.c.bf16 %v717, %v717
      %719 = vrot.lane.b32.xlu0 %v371, 56
      %v720 = vpop.permute.xlu0 %719
      %722 = vrot.lane.b32.xlu0 %v375, 64
      %v723 = vpop.permute.xlu0 %722
      %725 = vrot.lane.b32.xlu0 %v381, 72
      %v726 = vpop.permute.xlu0 %725
      %728 = vrot.lane.b32.xlu0 %v385, 80
      %v729 = vpop.permute.xlu0 %728
      %v731 = vsel %vm531, %v720, %v723
      %v732 = vsel %vm533, %v731, %v726
      %v733 = vsel %vm535, %v732, %v729
      %v734 = vpack.c.bf16 %v733, %v733
      %v736 = vsel %vm235, %v702, 0
      %v739 = vsel %vm235, %v718, 0
      %741 = vmatprep.subr.bf16.mxu0 0
      %742 = vmatpush1.bf16.xpose.msra.mxu0 %v739
      %743 = vmatprep.subr.bf16.mxu0 0
      %744 = vmatpush1.bf16.xpose.msra.mxu0 0
      %745 = vmatprep.subr.bf16.mxu0 0
      %746 = vmatpush1.bf16.xpose.msra.mxu0 0
      %747 = vmatprep.subr.bf16.mxu0 0
      %748 = vmatpush1.bf16.xpose.msra.mxu0 0
      %749 = vmatprep.subr.bf16.mxu0 0
      %750 = vmatpush1.bf16.xpose.msra.mxu0 0
      %751 = vmatprep.subr.bf16.mxu0 0
      %752 = vmatpush1.bf16.xpose.msra.mxu0 0
      %753 = vmatprep.subr.bf16.mxu0 0
      %754 = vmatpush1.bf16.xpose.msra.mxu0 0
      %755 = vmatprep.subr.bf16.mxu0 0
      %756 = vmatpush1.bf16.xpose.msra.mxu0 0
      %757 = vmatprep.subr.bf16.mxu0 0
      %758 = vmatpush1.bf16.xpose.msra.mxu0 0
      %759 = vmatprep.subr.bf16.mxu0 0
      %760 = vmatpush1.bf16.xpose.msra.mxu0 0
      %761 = vmatprep.subr.bf16.mxu0 0
      %762 = vmatpush1.bf16.xpose.msra.mxu0 0
      %763 = vmatprep.subr.bf16.mxu0 0
      %764 = vmatpush1.bf16.xpose.msra.mxu0 0
      %765 = vmatprep.subr.bf16.mxu0 0
      %766 = vmatpush1.bf16.xpose.msra.mxu0 0
      %767 = vmatprep.subr.bf16.mxu0 0
      %768 = vmatpush1.bf16.xpose.msra.mxu0 0
      %769 = vmatprep.subr.bf16.mxu0 0
      %770 = vmatpush1.bf16.xpose.msra.mxu0 0
      %771 = vmatprep.subr.bf16.mxu0 0
      %772 = vmatpush1.bf16.xpose.msra.mxu0 0
      %773 = vmatprep.mubr.bf16.mxu0 0
      %774 = vmatmul.mubr.bf16.gmra.mrb[0].mxu0 %v736
      %v775 = vpop.f32.mrb[0].mxu0
      %v776 = vadd.f32 0.0, %v775
      %v777 = vpop.f32.mrb[0].mxu0
      %v778 = vpop.f32.mrb[0].mxu0
      %v779 = vpop.f32.mrb[0].mxu0
      %780 = vdwg.mxu0
      %v781 = vsel %vm531, %v776, -inf
      %782 = vmax.xlane.f32.xlu0 %v781
      %v783 = vpop.xlane.xlu0 %782
      %v784 = vsub.f32 %v776, %v783
      %v785 = vmul.f32 %v784, 1.442695
      %v786 = vpow.pop %v785
      %v787 = vsel %vm531, %v786, 0.0
      %788 = vadd.xlane.f32.xlu0 %v787
      %v789 = vpop.xlane.xlu0 %788
      %v790 = vrcp.pop %v789
      %v791 = vmul.f32 %v786, %v790
      %v792 = vpack.c.bf16 %v791, %v791
      %v794 = vsel %vm531, %v792, 0
      %v797 = vsel %vm635, %v734, 0
      %799 = vmatprep.subr.bf16.mxu0 0
      %800 = vmatpush1.bf16.msra.mxu0 %v797
      %801 = vmatprep.subr.bf16.mxu0 0
      %802 = vmatpush1.bf16.msra.mxu0 0
      %803 = vmatprep.subr.bf16.mxu0 0
      %804 = vmatpush1.bf16.msra.mxu0 0
      %805 = vmatprep.subr.bf16.mxu0 0
      %806 = vmatpush1.bf16.msra.mxu0 0
      %807 = vmatprep.subr.bf16.mxu0 0
      %808 = vmatpush1.bf16.msra.mxu0 0
      %809 = vmatprep.subr.bf16.mxu0 0
      %810 = vmatpush1.bf16.msra.mxu0 0
      %811 = vmatprep.subr.bf16.mxu0 0
      %812 = vmatpush1.bf16.msra.mxu0 0
      %813 = vmatprep.subr.bf16.mxu0 0
      %814 = vmatpush1.bf16.msra.mxu0 0
      %815 = vmatprep.subr.bf16.mxu0 0
      %816 = vmatpush1.bf16.msra.mxu0 0
      %817 = vmatprep.subr.bf16.mxu0 0
      %818 = vmatpush1.bf16.msra.mxu0 0
      %819 = vmatprep.subr.bf16.mxu0 0
      %820 = vmatpush1.bf16.msra.mxu0 0
      %821 = vmatprep.subr.bf16.mxu0 0
      %822 = vmatpush1.bf16.msra.mxu0 0
      %823 = vmatprep.subr.bf16.mxu0 0
      %824 = vmatpush1.bf16.msra.mxu0 0
      %825 = vmatprep.subr.bf16.mxu0 0
      %826 = vmatpush1.bf16.msra.mxu0 0
      %827 = vmatprep.subr.bf16.mxu0 0
      %828 = vmatpush1.bf16.msra.mxu0 0
      %829 = vmatprep.subr.bf16.mxu0 0
      %830 = vmatpush1.bf16.msra.mxu0 0
      %831 = vmatprep.mubr.bf16.mxu0 0
      %832 = vmatmul.mubr.bf16.gmra.mrb[0].mxu0 %v794
      %v833 = vpop.f32.mrb[0].mxu0
      %v834 = vadd.f32 0.0, %v833
      %v835 = vpop.f32.mrb[0].mxu0
      %v836 = vpop.f32.mrb[0].mxu0
      %v837 = vpop.f32.mrb[0].mxu0
      %838 = vdwg.mxu0
      %840 = vrot.lane.b32.xlu0 %v834, 120
      %v841 = vpop.permute.xlu0 %840
      %842 = vrot.lane.b32.xlu0 %v834, 112
      %v843 = vpop.permute.xlu0 %842
      %844 = vrot.lane.b32.xlu0 %v834, 104
      %v845 = vpop.permute.xlu0 %844
      %846 = vrot.lane.b32.xlu0 %v515, 112
      %v847 = vpop.permute.xlu0 %846
      %849 = vrot.lane.b32.xlu0 %v516, 120
      %v850 = vpop.permute.xlu0 %849
      %852 = vrot.lane.b32.xlu0 %v518, 8
      %v853 = vpop.permute.xlu0 %852
      %v855 = vsel %vm531, %v847, %v850
      %v856 = vsel %vm533, %v855, %v517
      %v857 = vsel %vm535, %v856, %v853
      %v858 = vpack.c.bf16 %v857, %v857
      %859 = vrot.lane.b32.xlu0 %v371, 80
      %v860 = vpop.permute.xlu0 %859
      %862 = vrot.lane.b32.xlu0 %v375, 88
      %v863 = vpop.permute.xlu0 %862
      %865 = vrot.lane.b32.xlu0 %v381, 96
      %v866 = vpop.permute.xlu0 %865
      %868 = vrot.lane.b32.xlu0 %v385, 104
      %v869 = vpop.permute.xlu0 %868
      %v871 = vsel %vm531, %v860, %v863
      %v872 = vsel %vm533, %v871, %v866
      %v873 = vsel %vm535, %v872, %v869
      %v874 = vpack.c.bf16 %v873, %v873
      %875 = vrot.lane.b32.xlu0 %v371, 48
      %v876 = vpop.permute.xlu0 %875
      %878 = vrot.lane.b32.xlu0 %v375, 56
      %v879 = vpop.permute.xlu0 %878
      %881 = vrot.lane.b32.xlu0 %v381, 64
      %v882 = vpop.permute.xlu0 %881
      %884 = vrot.lane.b32.xlu0 %v385, 72
      %v885 = vpop.permute.xlu0 %884
      %v887 = vsel %vm531, %v876, %v879
      %v888 = vsel %vm533, %v887, %v882
      %v889 = vsel %vm535, %v888, %v885
      %v890 = vpack.c.bf16 %v889, %v889
      %v892 = vsel %vm235, %v858, 0
      %v895 = vsel %vm235, %v874, 0
      %897 = vmatprep.subr.bf16.mxu0 0
      %898 = vmatpush1.bf16.xpose.msra.mxu0 %v895
      %899 = vmatprep.subr.bf16.mxu0 0
      %900 = vmatpush1.bf16.xpose.msra.mxu0 0
      %901 = vmatprep.subr.bf16.mxu0 0
      %902 = vmatpush1.bf16.xpose.msra.mxu0 0
      %903 = vmatprep.subr.bf16.mxu0 0
      %904 = vmatpush1.bf16.xpose.msra.mxu0 0
      %905 = vmatprep.subr.bf16.mxu0 0
      %906 = vmatpush1.bf16.xpose.msra.mxu0 0
      %907 = vmatprep.subr.bf16.mxu0 0
      %908 = vmatpush1.bf16.xpose.msra.mxu0 0
      %909 = vmatprep.subr.bf16.mxu0 0
      %910 = vmatpush1.bf16.xpose.msra.mxu0 0
      %911 = vmatprep.subr.bf16.mxu0 0
      %912 = vmatpush1.bf16.xpose.msra.mxu0 0
      %913 = vmatprep.subr.bf16.mxu0 0
      %914 = vmatpush1.bf16.xpose.msra.mxu0 0
      %915 = vmatprep.subr.bf16.mxu0 0
      %916 = vmatpush1.bf16.xpose.msra.mxu0 0
      %917 = vmatprep.subr.bf16.mxu0 0
      %918 = vmatpush1.bf16.xpose.msra.mxu0 0
      %919 = vmatprep.subr.bf16.mxu0 0
      %920 = vmatpush1.bf16.xpose.msra.mxu0 0
      %921 = vmatprep.subr.bf16.mxu0 0
      %922 = vmatpush1.bf16.xpose.msra.mxu0 0
      %923 = vmatprep.subr.bf16.mxu0 0
      %924 = vmatpush1.bf16.xpose.msra.mxu0 0
      %925 = vmatprep.subr.bf16.mxu0 0
      %926 = vmatpush1.bf16.xpose.msra.mxu0 0
      %927 = vmatprep.subr.bf16.mxu0 0
      %928 = vmatpush1.bf16.xpose.msra.mxu0 0
      %929 = vmatprep.mubr.bf16.mxu0 0
      %930 = vmatmul.mubr.bf16.gmra.mrb[0].mxu0 %v892
      %v931 = vpop.f32.mrb[0].mxu0
      %v932 = vadd.f32 0.0, %v931
      %v933 = vpop.f32.mrb[0].mxu0
      %v934 = vpop.f32.mrb[0].mxu0
      %v935 = vpop.f32.mrb[0].mxu0
      %936 = vdwg.mxu0
      %v937 = vsel %vm531, %v932, -inf
      %938 = vmax.xlane.f32.xlu0 %v937
      %v939 = vpop.xlane.xlu0 %938
      %v940 = vsub.f32 %v932, %v939
      %v941 = vmul.f32 %v940, 1.442695
      %v942 = vpow.pop %v941
      %v943 = vsel %vm531, %v942, 0.0
      %944 = vadd.xlane.f32.xlu0 %v943
      %v945 = vpop.xlane.xlu0 %944
      %v946 = vrcp.pop %v945
      %v947 = vmul.f32 %v942, %v946
      %v948 = vpack.c.bf16 %v947, %v947
      %v950 = vsel %vm531, %v948, 0
      %v953 = vsel %vm635, %v890, 0
      %955 = vmatprep.subr.bf16.mxu0 0
      %956 = vmatpush1.bf16.msra.mxu0 %v953
      %957 = vmatprep.subr.bf16.mxu0 0
      %958 = vmatpush1.bf16.msra.mxu0 0
      %959 = vmatprep.subr.bf16.mxu0 0
      %960 = vmatpush1.bf16.msra.mxu0 0
      %961 = vmatprep.subr.bf16.mxu0 0
      %962 = vmatpush1.bf16.msra.mxu0 0
      %963 = vmatprep.subr.bf16.mxu0 0
      %964 = vmatpush1.bf16.msra.mxu0 0
      %965 = vmatprep.subr.bf16.mxu0 0
      %966 = vmatpush1.bf16.msra.mxu0 0
      %967 = vmatprep.subr.bf16.mxu0 0
      %968 = vmatpush1.bf16.msra.mxu0 0
      %969 = vmatprep.subr.bf16.mxu0 0
      %970 = vmatpush1.bf16.msra.mxu0 0
      %971 = vmatprep.subr.bf16.mxu0 0
      %972 = vmatpush1.bf16.msra.mxu0 0
      %973 = vmatprep.subr.bf16.mxu0 0
      %974 = vmatpush1.bf16.msra.mxu0 0
      %975 = vmatprep.subr.bf16.mxu0 0
      %976 = vmatpush1.bf16.msra.mxu0 0
      %977 = vmatprep.subr.bf16.mxu0 0
      %978 = vmatpush1.bf16.msra.mxu0 0
      %979 = vmatprep.subr.bf16.mxu0 0
      %980 = vmatpush1.bf16.msra.mxu0 0
      %981 = vmatprep.subr.bf16.mxu0 0
      %982 = vmatpush1.bf16.msra.mxu0 0
      %983 = vmatprep.subr.bf16.mxu0 0
      %984 = vmatpush1.bf16.msra.mxu0 0
      %985 = vmatprep.subr.bf16.mxu0 0
      %986 = vmatpush1.bf16.msra.mxu0 0
      %987 = vmatprep.mubr.bf16.mxu0 0
      %988 = vmatmul.mubr.bf16.gmra.mrb[0].mxu0 %v950
      %v989 = vpop.f32.mrb[0].mxu0
      %v990 = vadd.f32 0.0, %v989
      %v991 = vpop.f32.mrb[0].mxu0
      %v992 = vpop.f32.mrb[0].mxu0
      %v993 = vpop.f32.mrb[0].mxu0
      %994 = vdwg.mxu0
      %996 = vrot.lane.b32.xlu0 %v990, 120
      %v997 = vpop.permute.xlu0 %996
      %998 = vrot.lane.b32.xlu0 %v990, 112
      %v999 = vpop.permute.xlu0 %998
      %1000 = vrot.lane.b32.xlu0 %v990, 104
      %v1001 = vpop.permute.xlu0 %1000
      %1002 = vrot.lane.b32.xlu0 %v515, 104
      %v1003 = vpop.permute.xlu0 %1002
      %1005 = vrot.lane.b32.xlu0 %v516, 112
      %v1006 = vpop.permute.xlu0 %1005
      %1008 = vrot.lane.b32.xlu0 %v517, 120
      %v1009 = vpop.permute.xlu0 %1008
      %v1011 = vsel %vm531, %v1003, %v1006
      %v1012 = vsel %vm533, %v1011, %v1009
      %v1013 = vsel %vm535, %v1012, %v518
      %v1014 = vpack.c.bf16 %v1013, %v1013
      %1015 = vrot.lane.b32.xlu0 %v371, 72
      %v1016 = vpop.permute.xlu0 %1015
      %1018 = vrot.lane.b32.xlu0 %v375, 80
      %v1019 = vpop.permute.xlu0 %1018
      %1021 = vrot.lane.b32.xlu0 %v381, 88
      %v1022 = vpop.permute.xlu0 %1021
      %1024 = vrot.lane.b32.xlu0 %v385, 96
      %v1025 = vpop.permute.xlu0 %1024
      %v1027 = vsel %vm531, %v1016, %v1019
      %v1028 = vsel %vm533, %v1027, %v1022
      %v1029 = vsel %vm535, %v1028, %v1025
      %v1030 = vpack.c.bf16 %v1029, %v1029
      %1031 = vrot.lane.b32.xlu0 %v371, 40
      %v1032 = vpop.permute.xlu0 %1031
      %1034 = vrot.lane.b32.xlu0 %v375, 48
      %v1035 = vpop.permute.xlu0 %1034
      %1037 = vrot.lane.b32.xlu0 %v381, 56
      %v1038 = vpop.permute.xlu0 %1037
      %1040 = vrot.lane.b32.xlu0 %v385, 64
      %v1041 = vpop.permute.xlu0 %1040
      %v1043 = vsel %vm531, %v1032, %v1035
      %v1044 = vsel %vm533, %v1043, %v1038
      %v1045 = vsel %vm535, %v1044, %v1041
      %v1046 = vpack.c.bf16 %v1045, %v1045
      %v1048 = vsel %vm235, %v1014, 0
      %v1051 = vsel %vm235, %v1030, 0
      %1053 = vmatprep.subr.bf16.mxu0 0
      %1054 = vmatpush1.bf16.xpose.msra.mxu0 %v1051
      %1055 = vmatprep.subr.bf16.mxu0 0
      %1056 = vmatpush1.bf16.xpose.msra.mxu0 0
      %1057 = vmatprep.subr.bf16.mxu0 0
      %1058 = vmatpush1.bf16.xpose.msra.mxu0 0
      %1059 = vmatprep.subr.bf16.mxu0 0
      %1060 = vmatpush1.bf16.xpose.msra.mxu0 0
      %1061 = vmatprep.subr.bf16.mxu0 0
      %1062 = vmatpush1.bf16.xpose.msra.mxu0 0
      %1063 = vmatprep.subr.bf16.mxu0 0
      %1064 = vmatpush1.bf16.xpose.msra.mxu0 0
      %1065 = vmatprep.subr.bf16.mxu0 0
      %1066 = vmatpush1.bf16.xpose.msra.mxu0 0
      %1067 = vmatprep.subr.bf16.mxu0 0
      %1068 = vmatpush1.bf16.xpose.msra.mxu0 0
      %1069 = vmatprep.subr.bf16.mxu0 0
      %1070 = vmatpush1.bf16.xpose.msra.mxu0 0
      %1071 = vmatprep.subr.bf16.mxu0 0
      %1072 = vmatpush1.bf16.xpose.msra.mxu0 0
      %1073 = vmatprep.subr.bf16.mxu0 0
      %1074 = vmatpush1.bf16.xpose.msra.mxu0 0
      %1075 = vmatprep.subr.bf16.mxu0 0
      %1076 = vmatpush1.bf16.xpose.msra.mxu0 0
      %1077 = vmatprep.subr.bf16.mxu0 0
      %1078 = vmatpush1.bf16.xpose.msra.mxu0 0
      %1079 = vmatprep.subr.bf16.mxu0 0
      %1080 = vmatpush1.bf16.xpose.msra.mxu0 0
      %1081 = vmatprep.subr.bf16.mxu0 0
      %1082 = vmatpush1.bf16.xpose.msra.mxu0 0
      %1083 = vmatprep.subr.bf16.mxu0 0
      %1084 = vmatpush1.bf16.xpose.msra.mxu0 0
      %1085 = vmatprep.mubr.bf16.mxu0 0
      %1086 = vmatmul.mubr.bf16.gmra.mrb[0].mxu0 %v1048
      %v1087 = vpop.f32.mrb[0].mxu0
      %v1088 = vadd.f32 0.0, %v1087
      %v1089 = vpop.f32.mrb[0].mxu0
      %v1090 = vpop.f32.mrb[0].mxu0
      %v1091 = vpop.f32.mrb[0].mxu0
      %1092 = vdwg.mxu0
      %v1093 = vsel %vm531, %v1088, -inf
      %1094 = vmax.xlane.f32.xlu0 %v1093
      %v1095 = vpop.xlane.xlu0 %1094
      %v1096 = vsub.f32 %v1088, %v1095
      %v1097 = vmul.f32 %v1096, 1.442695
      %v1098 = vpow.pop %v1097
      %v1099 = vsel %vm531, %v1098, 0.0
      %1100 = vadd.xlane.f32.xlu0 %v1099
      %v1101 = vpop.xlane.xlu0 %1100
      %v1102 = vrcp.pop %v1101
      %v1103 = vmul.f32 %v1098, %v1102
      %v1104 = vpack.c.bf16 %v1103, %v1103
      %v1106 = vsel %vm531, %v1104, 0
      %v1109 = vsel %vm635, %v1046, 0
      %1111 = vmatprep.subr.bf16.mxu0 0
      %1112 = vmatpush1.bf16.msra.mxu0 %v1109
      %1113 = vmatprep.subr.bf16.mxu0 0
      %1114 = vmatpush1.bf16.msra.mxu0 0
      %1115 = vmatprep.subr.bf16.mxu0 0
      %1116 = vmatpush1.bf16.msra.mxu0 0
      %1117 = vmatprep.subr.bf16.mxu0 0
      %1118 = vmatpush1.bf16.msra.mxu0 0
      %1119 = vmatprep.subr.bf16.mxu0 0
      %1120 = vmatpush1.bf16.msra.mxu0 0
      %1121 = vmatprep.subr.bf16.mxu0 0
      %1122 = vmatpush1.bf16.msra.mxu0 0
      %1123 = vmatprep.subr.bf16.mxu0 0
      %1124 = vmatpush1.bf16.msra.mxu0 0
      %1125 = vmatprep.subr.bf16.mxu0 0
      %1126 = vmatpush1.bf16.msra.mxu0 0
      %1127 = vmatprep.subr.bf16.mxu0 0
      %1128 = vmatpush1.bf16.msra.mxu0 0
      %1129 = vmatprep.subr.bf16.mxu0 0
      %1130 = vmatpush1.bf16.msra.mxu0 0
      %1131 = vmatprep.subr.bf16.mxu0 0
      %1132 = vmatpush1.bf16.msra.mxu0 0
      %1133 = vmatprep.subr.bf16.mxu0 0
      %1134 = vmatpush1.bf16.msra.mxu0 0
      %1135 = vmatprep.subr.bf16.mxu0 0
      %1136 = vmatpush1.bf16.msra.mxu0 0
      %1137 = vmatprep.subr.bf16.mxu0 0
      %1138 = vmatpush1.bf16.msra.mxu0 0
      %1139 = vmatprep.subr.bf16.mxu0 0
      %1140 = vmatpush1.bf16.msra.mxu0 0
      %1141 = vmatprep.subr.bf16.mxu0 0
      %1142 = vmatpush1.bf16.msra.mxu0 0
      %1143 = vmatprep.mubr.bf16.mxu0 0
      %1144 = vmatmul.mubr.bf16.gmra.mrb[0].mxu0 %v1106
      %v1145 = vpop.f32.mrb[0].mxu0
      %v1146 = vadd.f32 0.0, %v1145
      %v1147 = vpop.f32.mrb[0].mxu0
      %v1148 = vpop.f32.mrb[0].mxu0
      %v1149 = vpop.f32.mrb[0].mxu0
      %1150 = vdwg.mxu0
      %1152 = vrot.lane.b32.xlu0 %v1146, 120
      %v1153 = vpop.permute.xlu0 %1152
      %1154 = vrot.lane.b32.xlu0 %v1146, 112
      %v1155 = vpop.permute.xlu0 %1154
      %1156 = vrot.lane.b32.xlu0 %v1146, 104
      %v1157 = vpop.permute.xlu0 %1156
      %1158 = vrot.lane.b32.xlu0 %v834, 8
      %v1159 = vpop.permute.xlu0 %1158
      %1160 = vrot.lane.b32.xlu0 %v841, 8
      %v1161 = vpop.permute.xlu0 %1160
      %1162 = vrot.lane.b32.xlu0 %v843, 8
      %v1163 = vpop.permute.xlu0 %1162
      %1164 = vrot.lane.b32.xlu0 %v845, 8
      %v1165 = vpop.permute.xlu0 %1164
      %1170 = vrot.lane.b32.xlu0 %v990, 16
      %v1171 = vpop.permute.xlu0 %1170
      %1172 = vrot.lane.b32.xlu0 %v997, 16
      %v1173 = vpop.permute.xlu0 %1172
      %1174 = vrot.lane.b32.xlu0 %v999, 16
      %v1175 = vpop.permute.xlu0 %1174
      %1176 = vrot.lane.b32.xlu0 %v1001, 16
      %v1177 = vpop.permute.xlu0 %1176
      %1182 = vrot.lane.b32.xlu0 %v1146, 24
      %v1183 = vpop.permute.xlu0 %1182
      %1184 = vrot.lane.b32.xlu0 %v1153, 24
      %v1185 = vpop.permute.xlu0 %1184
      %1186 = vrot.lane.b32.xlu0 %v1155, 24
      %v1187 = vpop.permute.xlu0 %1186
      %1188 = vrot.lane.b32.xlu0 %v1157, 24
      %v1189 = vpop.permute.xlu0 %1188
      %v1194 = vsel %vm531, %v674, %v1159
      %v1195 = vsel %vm531, %v681, %v1161
      %v1196 = vsel %vm531, %v684, %v1163
      %v1197 = vsel %vm531, %v687, %v1165
      %v1198 = vsel %vm533, %v1194, %v1171
      %v1199 = vsel %vm533, %v1195, %v1173
      %v1200 = vsel %vm533, %v1196, %v1175
      %v1201 = vsel %vm533, %v1197, %v1177
      %v1202 = vsel %vm535, %v1198, %v1183
      %v1203 = vsel %vm535, %v1199, %v1185
      %v1204 = vsel %vm535, %v1200, %v1187
      %v1205 = vsel %vm535, %v1201, %v1189
      %v1206 = vpack.c.bf16 %v1203, %v1202
      %v1207 = vpack.c.bf16 %v1205, %v1204
      %v1212 = vunpack.c.l.b16 %v210
      %v1213 = vunpack.c.l.b16 %v211
      %v1214 = vunpack.c.l.b16 %v212
      %v1215 = vunpack.c.l.b16 %v213
      %v1216 = vpack.c.b16 %v1213, %v1212
      %v1217 = vpack.c.b16 %v1215, %v1214
      %1218 = vrot.lane.b32.xlu0 %v1216, 96
      %v1219 = vpop.permute.xlu0 %1218
      %1220 = vrot.lane.b32.xlu0 %v1217, 96
      %v1221 = vpop.permute.xlu0 %1220
      %v1225 = vsel %vm235, %v1206, 0
      %v1228 = vsel %vm235, %v1207, 0
      %1230 = vmatprep.subr.bf16.mxu0 0
      %1231 = vmatpush1.bf16.msra.mxu0 %v1219
      %1232 = vmatprep.subr.bf16.mxu0 0
      %1233 = vmatpush1.bf16.msra.mxu0 %v1221
      %1234 = vmatprep.subr.bf16.mxu0 0
      %1235 = vmatpush1.bf16.msra.mxu0 0
      %1236 = vmatprep.subr.bf16.mxu0 0
      %1237 = vmatpush1.bf16.msra.mxu0 0
      %1238 = vmatprep.subr.bf16.mxu0 0
      %1239 = vmatpush1.bf16.msra.mxu0 0
      %1240 = vmatprep.subr.bf16.mxu0 0
      %1241 = vmatpush1.bf16.msra.mxu0 0
      %1242 = vmatprep.subr.bf16.mxu0 0
      %1243 = vmatpush1.bf16.msra.mxu0 0
      %1244 = vmatprep.subr.bf16.mxu0 0
      %1245 = vmatpush1.bf16.msra.mxu0 0
      %1246 = vmatprep.subr.bf16.mxu0 0
      %1247 = vmatpush1.bf16.msra.mxu0 0
      %1248 = vmatprep.subr.bf16.mxu0 0
      %1249 = vmatpush1.bf16.msra.mxu0 0
      %1250 = vmatprep.subr.bf16.mxu0 0
      %1251 = vmatpush1.bf16.msra.mxu0 0
      %1252 = vmatprep.subr.bf16.mxu0 0
      %1253 = vmatpush1.bf16.msra.mxu0 0
      %1254 = vmatprep.subr.bf16.mxu0 0
      %1255 = vmatpush1.bf16.msra.mxu0 0
      %1256 = vmatprep.subr.bf16.mxu0 0
      %1257 = vmatpush1.bf16.msra.mxu0 0
      %1258 = vmatprep.subr.bf16.mxu0 0
      %1259 = vmatpush1.bf16.msra.mxu0 0
      %1260 = vmatprep.subr.bf16.mxu0 0
      %1261 = vmatpush1.bf16.msra.mxu0 0
      %1262 = vmatprep.mubr.bf16.mxu0 0
      %1263 = vmatmul.mubr.bf16.gmra.mrb[0].mxu0 %v1225
      %v1264 = vpop.f32.mrb[0].mxu0
      %v1265 = vadd.f32 0.0, %v1264
      %v1266 = vpop.f32.mrb[0].mxu0
      %v1267 = vpop.f32.mrb[0].mxu0
      %v1268 = vadd.f32 0.0, %v1267
      %v1269 = vpop.f32.mrb[0].mxu0
      %1270 = vmatprep.mubr.bf16.mxu0 0
      %1271 = vmatmul.mubr.bf16.gmra.mrb[0].mxu0 %v1228
      %v1272 = vpop.f32.mrb[0].mxu0
      %v1273 = vadd.f32 0.0, %v1272
      %v1274 = vpop.f32.mrb[0].mxu0
      %v1275 = vpop.f32.mrb[0].mxu0
      %v1276 = vadd.f32 0.0, %v1275
      %v1277 = vpop.f32.mrb[0].mxu0
      %1278 = vdwg.mxu0
      %v1279 = vadd.f32 %v202, %v1265
      %v1280 = vadd.f32 %v203, %v1268
      %v1281 = vadd.f32 %v204, %v1273
      %v1282 = vadd.f32 %v205, %v1276
      %v1283 = vadd.f32 %v1279, %v230
      %v1284 = vadd.f32 %v1280, %v230
      %v1285 = vadd.f32 %v1281, %v230
      %v1286 = vadd.f32 %v1282, %v230
      %v1287 = vsel %vm235, %v1283, 0.0
      %1288 = vadd.xlane.f32.xlu0 %v1287
      %v1289 = vpop.xlane.xlu0 %1288
      %v1290 = vsel %vm235, %v1284, 0.0
      %1291 = vadd.xlane.f32.xlu0 %v1290
      %v1292 = vpop.xlane.xlu0 %1291
      %v1293 = vsel %vm235, %v1285, 0.0
      %1294 = vadd.xlane.f32.xlu0 %v1293
      %v1295 = vpop.xlane.xlu0 %1294
      %v1296 = vsel %vm235, %v1286, 0.0
      %1297 = vadd.xlane.f32.xlu0 %v1296
      %v1298 = vpop.xlane.xlu0 %1297
      %v1299 = vmul.f32 %v1289, %v248
      %v1300 = vmul.f32 %v1292, %v248
      %v1301 = vmul.f32 %v1295, %v248
      %v1302 = vmul.f32 %v1298, %v248
      %v1303 = vsub.f32 %v1283, %v1299
      %v1304 = vsub.f32 %v1284, %v1300
      %v1305 = vsub.f32 %v1285, %v1301
      %v1306 = vsub.f32 %v1286, %v1302
      %v1307 = vmul.f32 %v1303, %v1303
      %v1308 = vmul.f32 %v1304, %v1304
      %v1309 = vmul.f32 %v1305, %v1305
      %v1310 = vmul.f32 %v1306, %v1306
      %v1311 = vsel %vm235, %v1307, 0.0
      %1312 = vadd.xlane.f32.xlu0 %v1311
      %v1313 = vpop.xlane.xlu0 %1312
      %v1314 = vsel %vm235, %v1308, 0.0
      %1315 = vadd.xlane.f32.xlu0 %v1314
      %v1316 = vpop.xlane.xlu0 %1315
      %v1317 = vsel %vm235, %v1309, 0.0
      %1318 = vadd.xlane.f32.xlu0 %v1317
      %v1319 = vpop.xlane.xlu0 %1318
      %v1320 = vsel %vm235, %v1310, 0.0
      %1321 = vadd.xlane.f32.xlu0 %v1320
      %v1322 = vpop.xlane.xlu0 %1321
      %v1323 = vmul.f32 %v1313, %v248
      %v1324 = vmul.f32 %v1316, %v248
      %v1325 = vmul.f32 %v1319, %v248
      %v1326 = vmul.f32 %v1322, %v248
      %v1327 = vadd.f32 %v1323, 1e-05
      %v1328 = vadd.f32 %v1324, 1e-05
      %v1329 = vadd.f32 %v1325, 1e-05
      %v1330 = vadd.f32 %v1326, 1e-05
      %v1331 = vrsqrt.pop %v1327
      %v1332 = vrsqrt.pop %v1328
      %v1333 = vrsqrt.pop %v1329
      %v1334 = vrsqrt.pop %v1330
      %v1335 = vmul.f32 %v1303, %v1331
      %v1336 = vmul.f32 %v1304, %v1332
      %v1337 = vmul.f32 %v1305, %v1333
      %v1338 = vmul.f32 %v1306, %v1334
      %v1339 = vmul.f32 %v1335, %v228
      %v1340 = vmul.f32 %v1336, %v228
      %v1341 = vmul.f32 %v1337, %v228
      %v1342 = vmul.f32 %v1338, %v228
      %v1343 = vadd.f32 %v1339, %v229
      %v1344 = vadd.f32 %v1340, %v229
      %v1345 = vadd.f32 %v1341, %v229
      %v1346 = vadd.f32 %v1342, %v229
      %v1347 = vpack.c.bf16 %v1344, %v1343
      %v1348 = vpack.c.bf16 %v1346, %v1345
      %1349 = vrot.lane.b32.xlu0 %v1216, 64
      %v1350 = vpop.permute.xlu0 %1349
      %1351 = vrot.lane.b32.xlu0 %v1217, 64
      %v1352 = vpop.permute.xlu0 %1351
      %v1356 = vsel %vm235, %v1347, 0
      %v1359 = vsel %vm235, %v1348, 0
      %1361 = vmatprep.subr.bf16.mxu0 0
      %1362 = vmatpush1.bf16.msra.mxu0 %v1350
      %1363 = vmatprep.subr.bf16.mxu0 0
      %1364 = vmatpush1.bf16.msra.mxu0 %v1352
      %1365 = vmatprep.subr.bf16.mxu0 0
      %1366 = vmatpush1.bf16.msra.mxu0 0
      %1367 = vmatprep.subr.bf16.mxu0 0
      %1368 = vmatpush1.bf16.msra.mxu0 0
      %1369 = vmatprep.subr.bf16.mxu0 0
      %1370 = vmatpush1.bf16.msra.mxu0 0
      %1371 = vmatprep.subr.bf16.mxu0 0
      %1372 = vmatpush1.bf16.msra.mxu0 0
      %1373 = vmatprep.subr.bf16.mxu0 0
      %1374 = vmatpush1.bf16.msra.mxu0 0
      %1375 = vmatprep.subr.bf16.mxu0 0
      %1376 = vmatpush1.bf16.msra.mxu0 0
      %1377 = vmatprep.subr.bf16.mxu0 0
      %1378 = vmatpush1.bf16.msra.mxu0 0
      %1379 = vmatprep.subr.bf16.mxu0 0
      %1380 = vmatpush1.bf16.msra.mxu0 0
      %1381 = vmatprep.subr.bf16.mxu0 0
      %1382 = vmatpush1.bf16.msra.mxu0 0
      %1383 = vmatprep.subr.bf16.mxu0 0
      %1384 = vmatpush1.bf16.msra.mxu0 0
      %1385 = vmatprep.subr.bf16.mxu0 0
      %1386 = vmatpush1.bf16.msra.mxu0 0
      %1387 = vmatprep.subr.bf16.mxu0 0
      %1388 = vmatpush1.bf16.msra.mxu0 0
      %1389 = vmatprep.subr.bf16.mxu0 0
      %1390 = vmatpush1.bf16.msra.mxu0 0
      %1391 = vmatprep.subr.bf16.mxu0 0
      %1392 = vmatpush1.bf16.msra.mxu0 0
      %1393 = vmatprep.mubr.bf16.mxu0 0
      %1394 = vmatmul.mubr.bf16.gmra.mrb[0].mxu0 %v1356
      %v1395 = vpop.f32.mrb[0].mxu0
      %v1396 = vadd.f32 %v232, %v1395
      %v1397 = vpop.f32.mrb[0].mxu0
      %v1398 = vpop.f32.mrb[0].mxu0
      %v1399 = vadd.f32 %v232, %v1398
      %v1400 = vpop.f32.mrb[0].mxu0
      %1401 = vmatprep.mubr.bf16.mxu0 0
      %1402 = vmatmul.mubr.bf16.gmra.mrb[0].mxu0 %v1359
      %v1403 = vpop.f32.mrb[0].mxu0
      %v1404 = vadd.f32 %v232, %v1403
      %v1405 = vpop.f32.mrb[0].mxu0
      %v1406 = vpop.f32.mrb[0].mxu0
      %v1407 = vadd.f32 %v232, %v1406
      %v1408 = vpop.f32.mrb[0].mxu0
      %1409 = vdwg.mxu0
      %v1410 = vmax.f32 %v1396, 0.0
      %v1411 = vmax.f32 %v1399, 0.0
      %v1412 = vmax.f32 %v1404, 0.0
      %v1413 = vmax.f32 %v1407, 0.0
      %v1414 = vpack.c.bf16 %v1411, %v1410
      %v1415 = vpack.c.bf16 %v1413, %v1412
      %v1424 = vunpack.c.l.b16 %v218
      %v1425 = vunpack.c.l.b16 %v219
      %v1426 = vunpack.c.l.b16 %v220
      %v1427 = vunpack.c.l.b16 %v221
      %v1428 = vunpack.c.l.b16 %v222
      %v1429 = vunpack.c.l.b16 %v223
      %v1430 = vunpack.c.l.b16 %v224
      %v1431 = vunpack.c.l.b16 %v225
      %v1432 = vpack.c.b16 %v1425, %v1424
      %v1433 = vpack.c.b16 %v1427, %v1426
      %v1434 = vpack.c.b16 %v1429, %v1428
      %v1435 = vpack.c.b16 %v1431, %v1430
      %vm1440 = vcmask 523264
      %v1442 = vsel %vm1440, %v1414, 0
      %v1445 = vsel %vm1440, %v1415, 0
      %1447 = vmatprep.subr.bf16.mxu0 0
      %1448 = vmatpush1.bf16.msra.mxu0 %v1432
      %1449 = vmatprep.subr.bf16.mxu0 0
      %1450 = vmatpush1.bf16.msra.mxu0 %v1433
      %1451 = vmatprep.subr.bf16.mxu0 0
      %1452 = vmatpush1.bf16.msra.mxu0 %v1434
      %1453 = vmatprep.subr.bf16.mxu0 0
      %1454 = vmatpush1.bf16.msra.mxu0 %v1435
      %1455 = vmatprep.subr.bf16.mxu0 0
      %1456 = vmatpush1.bf16.msra.mxu0 0
      %1457 = vmatprep.subr.bf16.mxu0 0
      %1458 = vmatpush1.bf16.msra.mxu0 0
      %1459 = vmatprep.subr.bf16.mxu0 0
      %1460 = vmatpush1.bf16.msra.mxu0 0
      %1461 = vmatprep.subr.bf16.mxu0 0
      %1462 = vmatpush1.bf16.msra.mxu0 0
      %1463 = vmatprep.subr.bf16.mxu0 0
      %1464 = vmatpush1.bf16.msra.mxu0 0
      %1465 = vmatprep.subr.bf16.mxu0 0
      %1466 = vmatpush1.bf16.msra.mxu0 0
      %1467 = vmatprep.subr.bf16.mxu0 0
      %1468 = vmatpush1.bf16.msra.mxu0 0
      %1469 = vmatprep.subr.bf16.mxu0 0
      %1470 = vmatpush1.bf16.msra.mxu0 0
      %1471 = vmatprep.subr.bf16.mxu0 0
      %1472 = vmatpush1.bf16.msra.mxu0 0
      %1473 = vmatprep.subr.bf16.mxu0 0
      %1474 = vmatpush1.bf16.msra.mxu0 0
      %1475 = vmatprep.subr.bf16.mxu0 0
      %1476 = vmatpush1.bf16.msra.mxu0 0
      %1477 = vmatprep.subr.bf16.mxu0 0
      %1478 = vmatpush1.bf16.msra.mxu0 0
      %1479 = vmatprep.mubr.bf16.mxu0 0
      %1480 = vmatmul.mubr.bf16.gmra.mrb[0].mxu0 %v1442
      %v1481 = vpop.f32.mrb[0].mxu0
      %v1482 = vadd.f32 %v231, %v1481
      %v1483 = vpop.f32.mrb[0].mxu0
      %v1484 = vpop.f32.mrb[0].mxu0
      %v1485 = vadd.f32 %v231, %v1484
      %v1486 = vpop.f32.mrb[0].mxu0
      %1487 = vmatprep.mubr.bf16.mxu0 0
      %1488 = vmatmul.mubr.bf16.gmra.mrb[0].mxu0 %v1445
      %v1489 = vpop.f32.mrb[0].mxu0
      %v1490 = vadd.f32 %v231, %v1489
      %v1491 = vpop.f32.mrb[0].mxu0
      %v1492 = vpop.f32.mrb[0].mxu0
      %v1493 = vadd.f32 %v231, %v1492
      %v1494 = vpop.f32.mrb[0].mxu0
      %1495 = vdwg.mxu0
      %v1496 = vadd.f32 %v1283, %v1482
      %v1497 = vadd.f32 %v1284, %v1485
      %v1498 = vadd.f32 %v1285, %v1490
      %v1499 = vadd.f32 %v1286, %v1493
      %1500 = vst.msk [vmem:[%s199] sm:$0xff] %vm235, %v1496
      %1501 = vst.msk [vmem:[%s199 + $0x8] sm:$0xff] %vm235, %v1497
      %1502 = vst.msk [vmem:[%s199 + $0x10] sm:$0xff] %vm235, %v1498
      %1503 = vst.msk [vmem:[%s199 + $0x18] sm:$0xff] %vm235, %v1499
      %s1504 = smul.u32 4, %s15
      %p1505 = scmp.lt.s32.totalorder %s1504, 7
      %s1506 = scalar_select %p1505, %s1504, 7
      %s1507 = smul.addr %s1506, 8
      %s1508 = scalar_lea.vmem %s4, %s1507
      // Predicated region
      $region37: #{tpu_custom_call.1} parent=35 // pred_check
        %p1509 = pneg %p122
      $region38: #{tpu_custom_call.1} parent=35 // pred_check_branch
        %1511 = sbr.rel (%p1509) target = $region40
      $region39: #{tpu_custom_call.1} parent=35 // pred_region
        %s1512 = smul.u32 4, %s15
      $region40: #{tpu_custom_call.1} parent=35 // pred_fallthru
        _
    $region36: #{tpu_custom_call.1} parent=5 // pred_fallthru
      _
    %p1513 = scmp.le.s32.totalorder 2, %s10
    // Predicated region
    $region41: #{tpu_custom_call.1} parent=5 // pred_check
      %p1514 = pneg %p1513
    $region42: #{tpu_custom_call.1} parent=5 // pred_check_branch
      %1516 = sbr.rel (%p1514) target = $region44
    $region43: #{tpu_custom_call.1} parent=5 // pred_region
      %s1517 = ssub.s32 %s10, 2
      // Predicated region
      $region45: #{tpu_custom_call.1} parent=43 // pred_check
        %p1518 = pneg %p128
      $region46: #{tpu_custom_call.1} parent=43 // pred_check_branch
        %1520 = sbr.rel (%p1518) target = $region48
      $region47: #{tpu_custom_call.1} parent=43 // pred_region
        %s1521 = smul.u32 4, %s16
        %p1522 = scmp.lt.s32.totalorder %s1521, 7
        %s1523 = scalar_select %p1522, %s1521, 7
        %s1524 = smul.addr %s1523, 8
        %s1525 = scalar_lea.vmem %s4, %s1524
      $region48: #{tpu_custom_call.1} parent=43 // pred_fallthru
        _
    $region44: #{tpu_custom_call.1} parent=5 // pred_fallthru
      _
  $region6: #{tpu_custom_call.1} parent=0 // loop_footer
    %s14 = sadd.s32 1, %s10
  $region7: #{tpu_custom_call.1} parent=0 // loop_footer_branch
    %9 = sbr.rel target = $region3
  $region8: #{tpu_custom_call.1} parent=0 // loop_exit
    _

</llo_original>
